<compile_context>
chip_gen: v5e
topology: v5e:2x2
jax: 0.10.0
libtpu: 0.0.40
codegen_flags: <defaults>
</compile_context>

<pallas_src>
import functools

import jax
import jax.numpy as jnp
from jax.experimental import pallas as pl
from jax.experimental.pallas import tpu as pltpu


# ----------------------------------------------------------------------------
# Fused kernel: QKV proj -> MHA -> +res -> LN1 -> FFN -> +res -> LN2
# One grid step = one (batch element, query-row tile).
# ----------------------------------------------------------------------------
def _encoder_layer_kernel(xq_ref, xkv_ref,
                          wq_ref, bq_ref, wkv_ref, bkv_ref, wo_ref, bo_ref,
                          g1_ref, beta1_ref,
                          w1_ref, b1_ref, w2_ref, b2_ref,
                          g2_ref, beta2_ref,
                          o_ref, *, n_heads):
    f32 = jnp.float32
    bf16 = jnp.bfloat16

    xq = xq_ref[0].astype(f32)       # [TQ, D] query rows (also the residual)
    xkv = xkv_ref[0].astype(f32)     # [S,  D] full sequence of this batch elem
    TQ, D = xq.shape
    S = xkv.shape[0]
    Dh = D // n_heads
    scale = 1.0 / (Dh ** 0.5)

    # ---- projections: bf16 operands, fp32 accumulate on the MXU -------------
    q = jnp.dot(xq.astype(bf16), wq_ref[...],
                preferred_element_type=f32) + bq_ref[...]          # [TQ, D]
    q = q * scale                                                  # fold 1/sqrt(Dh)
    kv = jnp.dot(xkv.astype(bf16), wkv_ref[...],
                 preferred_element_type=f32) + bkv_ref[...]        # [S, 2D]
    k = kv[:, :D]
    v = kv[:, D:]

    # ---- batched-head attention (single einsum over all heads) --------------
    qh = q.reshape(TQ, n_heads, Dh).transpose(1, 0, 2)             # [H, TQ, Dh]
    kh = k.reshape(S, n_heads, Dh).transpose(1, 0, 2)              # [H, S,  Dh]
    vh = v.reshape(S, n_heads, Dh).transpose(1, 0, 2)              # [H, S,  Dh]

    s = jnp.einsum('hqd,hkd->hqk', qh.astype(bf16), kh.astype(bf16),
                   preferred_element_type=f32)                     # [H, TQ, S]
    m = jnp.max(s, axis=-1, keepdims=True)
    e = jnp.exp(s - m)
    denom = jnp.sum(e, axis=-1, keepdims=True)
    p = e * pl.reciprocal(denom, approx=True)                      # EUP, not VPU div

    ctx = jnp.einsum('hqk,hkd->hqd', p.astype(bf16), vh.astype(bf16),
                     preferred_element_type=f32)                   # [H, TQ, Dh]
    ctx = ctx.transpose(1, 0, 2).reshape(TQ, D)                    # [TQ, D]

    attn = jnp.dot(ctx.astype(bf16), wo_ref[...],
                   preferred_element_type=f32) + bo_ref[...]

    # ---- residual + post-LayerNorm 1 (fp32) ----------------------------------
    y = xq + attn
    mu = jnp.mean(y, axis=-1, keepdims=True)
    var = jnp.mean((y - mu) ** 2, axis=-1, keepdims=True)
    y1 = (y - mu) * jax.lax.rsqrt(var + 1e-5) * g1_ref[...] + beta1_ref[...]

    # ---- FFN + residual + post-LayerNorm 2 -----------------------------------
    h = jnp.dot(y1.astype(bf16), w1_ref[...],
                preferred_element_type=f32) + b1_ref[...]          # [TQ, d_inner]
    h = jnp.maximum(h, 0.0)
    f = jnp.dot(h.astype(bf16), w2_ref[...],
                preferred_element_type=f32) + b2_ref[...]          # [TQ, D]

    y = y1 + f
    mu = jnp.mean(y, axis=-1, keepdims=True)
    var = jnp.mean((y - mu) ** 2, axis=-1, keepdims=True)
    y2 = (y - mu) * jax.lax.rsqrt(var + 1e-5) * g2_ref[...] + beta2_ref[...]

    o_ref[0] = y2.astype(o_ref.dtype)


# ----------------------------------------------------------------------------
# Wrapper
# ----------------------------------------------------------------------------
def transformer_encoder_layer(x, params, n_heads, *, tq=None):
    B, S, D = x.shape
    if tq is None:
        # query-row tile: sized so weights + 2x(tq, d_inner) fp32 intermediates
        # comfortably fit v7x's 64 MiB VMEM; v6e/v5e can sweep this higher.
        tq = S if S <= 256 else 256
    assert S % tq == 0, "S must be a multiple of the query tile"
    n_q = S // tq

    bf16 = jnp.bfloat16
    # bf16 weights (half the DMA bytes / VMEM residency; fp32 accumulate in-kernel)
    wq = params['wq'].astype(bf16)
    wkv = jnp.concatenate([params['wk'], params['wv']], axis=1).astype(bf16)
    bkv = jnp.concatenate([params['bk'], params['bv']], axis=1)
    wo = params['wo'].astype(bf16)
    w1 = params['w1'].astype(bf16)
    w2 = params['w2'].astype(bf16)

    args = (x, x,
            wq, params['bq'], wkv, bkv, wo, params['bo'],
            params['ln1_g'], params['ln1_b'],
            w1, params['b1'], w2, params['b2'],
            params['ln2_g'], params['ln2_b'])

    def _resident(a):   # full-extent block, constant index -> stays in VMEM
        return pl.BlockSpec(a.shape, lambda b, i: (0, 0))

    in_specs = [
        pl.BlockSpec((1, tq, D), lambda b, i: (b, i, 0)),   # query-row tile
        pl.BlockSpec((1, S, D), lambda b, i: (b, 0, 0)),    # full seq for K/V
    ] + [_resident(a) for a in args[2:]]

    grid_spec = pltpu.PrefetchScalarGridSpec(
        num_scalar_prefetch=0,
        grid=(B, n_q),
        in_specs=in_specs,
        out_specs=pl.BlockSpec((1, tq, D), lambda b, i: (b, i, 0)),
    )

    return pl.pallas_call(
        functools.partial(_encoder_layer_kernel, n_heads=n_heads),
        out_shape=jax.ShapeDtypeStruct((B, S, D), x.dtype),
        grid_spec=grid_spec,
        compiler_params=pltpu.CompilerParams(
            dimension_semantics=("parallel", "parallel")),
    )(*args)


# ----------------------------------------------------------------------------
# Pure-JAX fp32 reference (PyTorch semantics) for the correctness check
# ----------------------------------------------------------------------------
def reference(x, p, n_heads):
    B, S, D = x.shape
    Dh = D // n_heads

    def ln(y, g, b):
        mu = y.mean(-1, keepdims=True)
        var = ((y - mu) ** 2).mean(-1, keepdims=True)
        return (y - mu) / jnp.sqrt(var + 1e-5) * g + b

    q = x @ p['wq'] + p['bq']
    k = x @ p['wk'] + p['bk']
    v = x @ p['wv'] + p['bv']
    q = q.reshape(B, S, n_heads, Dh).transpose(0, 2, 1, 3)
    k = k.reshape(B, S, n_heads, Dh).transpose(0, 2, 1, 3)
    v = v.reshape(B, S, n_heads, Dh).transpose(0, 2, 1, 3)
    s = jnp.einsum('bhqd,bhkd->bhqk', q, k) / (Dh ** 0.5)
    pmat = jax.nn.softmax(s, axis=-1)
    ctx = jnp.einsum('bhqk,bhkd->bhqd', pmat, v).transpose(0, 2, 1, 3).reshape(B, S, D)
    attn = ctx @ p['wo'] + p['bo']
    x1 = ln(x + attn, p['ln1_g'], p['ln1_b'])
    f = jnp.maximum(x1 @ p['w1'] + p['b1'], 0.0) @ p['w2'] + p['b2']
    return ln(x1 + f, p['ln2_g'], p['ln2_b'])


# ----------------------------------------------------------------------------
# Deterministic parameter init (shapes implied by the module's __init__)
# ----------------------------------------------------------------------------
def init_params(key, d_model, d_inner):
    ks = jax.random.split(key, 6)
    s = 0.02
    return {
        # attention projections stored as [in, out] so the kernel does x @ W
        'wq': jax.random.normal(ks[0], (d_model, d_model), jnp.float32) * s,
        'wk': jax.random.normal(ks[1], (d_model, d_model), jnp.float32) * s,
        'wv': jax.random.normal(ks[2], (d_model, d_model), jnp.float32) * s,
        'wo': jax.random.normal(ks[3], (d_model, d_model), jnp.float32) * s,
        'bq': jnp.zeros((1, d_model), jnp.float32),
        'bk': jnp.zeros((1, d_model), jnp.float32),
        'bv': jnp.zeros((1, d_model), jnp.float32),
        'bo': jnp.zeros((1, d_model), jnp.float32),
        'ln1_g': jnp.ones((1, d_model), jnp.float32),
        'ln1_b': jnp.zeros((1, d_model), jnp.float32),
        # FFN
        'w1': jax.random.normal(ks[4], (d_model, d_inner), jnp.float32) * s,
        'b1': jnp.zeros((1, d_inner), jnp.float32),
        'w2': jax.random.normal(ks[5], (d_inner, d_model), jnp.float32) * s,
        'b2': jnp.zeros((1, d_model), jnp.float32),
        'ln2_g': jnp.ones((1, d_model), jnp.float32),
        'ln2_b': jnp.zeros((1, d_model), jnp.float32),
    }


if __name__ == "__main__":
    B, S, D, H, D_INNER = 2, 8, 32, 4, 64

    key = jax.random.PRNGKey(0)
    k_x, k_p = jax.random.split(key)
    x = jax.random.normal(k_x, (B, S, D), jnp.float32)
    params = init_params(k_p, D, D_INNER)

    out = transformer_encoder_layer(x, params, H)
    out = jax.block_until_ready(out)

    ref = reference(x, params, H)
    assert out.shape == (B, S, D)
    # kernel uses bf16 matmul operands (fp32 accumulate) + approx reciprocal,
    # so compare against the fp32 reference with a bf16-appropriate tolerance.
    assert jnp.allclose(out, ref, atol=2e-2, rtol=2e-2), "mismatch vs reference"

    print("KERNEL_OK")
</pallas_src>

<mosaic_0001>
module attributes {stable_mosaic.version = 11 : i64} {
  func.func @_encoder_layer_kernel(%arg0: i32, %arg1: i32, %arg2: memref<1x8x32xf32, #tpu.memory_space<vmem>>, %arg3: memref<1x8x32xf32, #tpu.memory_space<vmem>>, %arg4: memref<32x32xbf16, #tpu.memory_space<vmem>>, %arg5: memref<1x32xf32, #tpu.memory_space<vmem>>, %arg6: memref<32x64xbf16, #tpu.memory_space<vmem>>, %arg7: memref<1x64xf32, #tpu.memory_space<vmem>>, %arg8: memref<32x32xbf16, #tpu.memory_space<vmem>>, %arg9: memref<1x32xf32, #tpu.memory_space<vmem>>, %arg10: memref<1x32xf32, #tpu.memory_space<vmem>>, %arg11: memref<1x32xf32, #tpu.memory_space<vmem>>, %arg12: memref<32x64xbf16, #tpu.memory_space<vmem>>, %arg13: memref<1x64xf32, #tpu.memory_space<vmem>>, %arg14: memref<64x32xbf16, #tpu.memory_space<vmem>>, %arg15: memref<1x32xf32, #tpu.memory_space<vmem>>, %arg16: memref<1x32xf32, #tpu.memory_space<vmem>>, %arg17: memref<1x32xf32, #tpu.memory_space<vmem>>, %arg18: memref<1x8x32xf32, #tpu.memory_space<vmem>>) attributes {dimension_semantics = [#tpu.dimension_semantics<parallel>, #tpu.dimension_semantics<parallel>], iteration_bounds = array<i64: 2, 1>, scalar_prefetch = 0 : i64, scratch_operands = 0 : i64, tpu.core_type = #tpu.core_type<tc>, window_params = [{transform_indices = @transform_0, window_bounds = array<i64: 1, 8, 32>}, {transform_indices = @transform_1, window_bounds = array<i64: 1, 8, 32>}, {pipeline_mode = #tpu.pipeline_mode<synchronous>, transform_indices = @transform_2, window_bounds = array<i64: 32, 32>}, {pipeline_mode = #tpu.pipeline_mode<synchronous>, transform_indices = @transform_3, window_bounds = array<i64: 1, 32>}, {pipeline_mode = #tpu.pipeline_mode<synchronous>, transform_indices = @transform_4, window_bounds = array<i64: 32, 64>}, {pipeline_mode = #tpu.pipeline_mode<synchronous>, transform_indices = @transform_5, window_bounds = array<i64: 1, 64>}, {pipeline_mode = #tpu.pipeline_mode<synchronous>, transform_indices = @transform_6, window_bounds = array<i64: 32, 32>}, {pipeline_mode = #tpu.pipeline_mode<synchronous>, transform_indices = @transform_7, window_bounds = array<i64: 1, 32>}, {pipeline_mode = #tpu.pipeline_mode<synchronous>, transform_indices = @transform_8, window_bounds = array<i64: 1, 32>}, {pipeline_mode = #tpu.pipeline_mode<synchronous>, transform_indices = @transform_9, window_bounds = array<i64: 1, 32>}, {pipeline_mode = #tpu.pipeline_mode<synchronous>, transform_indices = @transform_10, window_bounds = array<i64: 32, 64>}, {pipeline_mode = #tpu.pipeline_mode<synchronous>, transform_indices = @transform_11, window_bounds = array<i64: 1, 64>}, {pipeline_mode = #tpu.pipeline_mode<synchronous>, transform_indices = @transform_12, window_bounds = array<i64: 64, 32>}, {pipeline_mode = #tpu.pipeline_mode<synchronous>, transform_indices = @transform_13, window_bounds = array<i64: 1, 32>}, {pipeline_mode = #tpu.pipeline_mode<synchronous>, transform_indices = @transform_14, window_bounds = array<i64: 1, 32>}, {pipeline_mode = #tpu.pipeline_mode<synchronous>, transform_indices = @transform_15, window_bounds = array<i64: 1, 32>}, {transform_indices = @transform_16, window_bounds = array<i64: 1, 8, 32>}]} {
    %c0 = arith.constant 0 : index
    %c0_0 = arith.constant 0 : index
    %c0_1 = arith.constant 0 : index
    %0 = vector.load %arg2[%c0, %c0_0, %c0_1] : memref<1x8x32xf32, #tpu.memory_space<vmem>>, vector<1x8x32xf32>
    %1 = vector.shape_cast %0 : vector<1x8x32xf32> to vector<8x32xf32>
    %c0_2 = arith.constant 0 : index
    %c0_3 = arith.constant 0 : index
    %c0_4 = arith.constant 0 : index
    %2 = vector.load %arg3[%c0_2, %c0_3, %c0_4] : memref<1x8x32xf32, #tpu.memory_space<vmem>>, vector<1x8x32xf32>
    %3 = vector.shape_cast %2 : vector<1x8x32xf32> to vector<8x32xf32>
    %4 = arith.truncf %1 : vector<8x32xf32> to vector<8x32xbf16>
    %c0_5 = arith.constant 0 : index
    %c0_6 = arith.constant 0 : index
    %5 = vector.load %arg4[%c0_5, %c0_6] : memref<32x32xbf16, #tpu.memory_space<vmem>>, vector<32x32xbf16>
    %cst = arith.constant dense<0.000000e+00> : vector<8x32xf32>
    %6 = tpu.matmul %4, %5, %cst {dimension_numbers = #tpu.dot_dimension_numbers<[1], [0], [0], [1], [0, 0, 1, 1], [], []>} : vector<8x32xbf16>, vector<32x32xbf16>, vector<8x32xf32> -> vector<8x32xf32>
    %c0_7 = arith.constant 0 : index
    %c0_8 = arith.constant 0 : index
    %7 = vector.load %arg5[%c0_7, %c0_8] : memref<1x32xf32, #tpu.memory_space<vmem>>, vector<1x32xf32>
    %8 = vector.broadcast %7 : vector<1x32xf32> to vector<8x32xf32>
    %9 = arith.addf %6, %8 : vector<8x32xf32>
    %cst_9 = arith.constant 0.353553385 : f32
    %10 = vector.broadcast %cst_9 : f32 to vector<8x32xf32>
    %11 = arith.mulf %9, %10 : vector<8x32xf32>
    %12 = arith.truncf %3 : vector<8x32xf32> to vector<8x32xbf16>
    %c0_10 = arith.constant 0 : index
    %c0_11 = arith.constant 0 : index
    %13 = vector.load %arg6[%c0_10, %c0_11] : memref<32x64xbf16, #tpu.memory_space<vmem>>, vector<32x64xbf16>
    %cst_12 = arith.constant dense<0.000000e+00> : vector<8x64xf32>
    %14 = tpu.matmul %12, %13, %cst_12 {dimension_numbers = #tpu.dot_dimension_numbers<[1], [0], [0], [1], [0, 0, 1, 1], [], []>} : vector<8x32xbf16>, vector<32x64xbf16>, vector<8x64xf32> -> vector<8x64xf32>
    %c0_13 = arith.constant 0 : index
    %c0_14 = arith.constant 0 : index
    %15 = vector.load %arg7[%c0_13, %c0_14] : memref<1x64xf32, #tpu.memory_space<vmem>>, vector<1x64xf32>
    %16 = vector.broadcast %15 : vector<1x64xf32> to vector<8x64xf32>
    %17 = arith.addf %14, %16 : vector<8x64xf32>
    %18 = vector.extract_strided_slice %17 {offsets = [0, 0], sizes = [8, 32], strides = [1, 1]} : vector<8x64xf32> to vector<8x32xf32>
    %19 = vector.extract_strided_slice %17 {offsets = [0, 32], sizes = [8, 32], strides = [1, 1]} : vector<8x64xf32> to vector<8x32xf32>
    %20 = vector.shape_cast %11 : vector<8x32xf32> to vector<8x4x8xf32>
    %21 = tpu.transpose %20, [1, 0, 2] : vector<8x4x8xf32> -> vector<4x8x8xf32>
    %22 = vector.shape_cast %18 : vector<8x32xf32> to vector<8x4x8xf32>
    %23 = tpu.transpose %22, [1, 0, 2] : vector<8x4x8xf32> -> vector<4x8x8xf32>
    %24 = vector.shape_cast %19 : vector<8x32xf32> to vector<8x4x8xf32>
    %25 = tpu.transpose %24, [1, 0, 2] : vector<8x4x8xf32> -> vector<4x8x8xf32>
    %26 = arith.truncf %21 : vector<4x8x8xf32> to vector<4x8x8xbf16>
    %27 = arith.truncf %23 : vector<4x8x8xf32> to vector<4x8x8xbf16>
    "tpu.trace_start"() <{level = 10 : i32, message = "hqd,hkd->hqk"}> : () -> ()
    %cst_15 = arith.constant dense<0.000000e+00> : vector<4x8x8xf32>
    %28 = tpu.matmul %26, %27, %cst_15 {dimension_numbers = #tpu.dot_dimension_numbers<[2], [2], [1], [1], [0, 0, 0, 1, 1, 1], [0], [0]>} : vector<4x8x8xbf16>, vector<4x8x8xbf16>, vector<4x8x8xf32> -> vector<4x8x8xf32>
    "tpu.trace_stop"() : () -> ()
    %cst_16 = arith.constant dense<0xFF800000> : vector<4x8xf32>
    %29 = vector.multi_reduction <maximumf>, %28, %cst_16 [2] : vector<4x8x8xf32> to vector<4x8xf32>
    %30 = vector.shape_cast %29 : vector<4x8xf32> to vector<4x8x1xf32>
    %31 = vector.broadcast %30 : vector<4x8x1xf32> to vector<4x8x8xf32>
    %32 = arith.subf %28, %31 : vector<4x8x8xf32>
    %33 = math.exp %32 : vector<4x8x8xf32>
    %cst_17 = arith.constant dense<0.000000e+00> : vector<4x8xf32>
    %34 = vector.multi_reduction <add>, %33, %cst_17 [2] : vector<4x8x8xf32> to vector<4x8xf32>
    %35 = vector.shape_cast %34 : vector<4x8xf32> to vector<4x8x1xf32>
    %36 = tpu.reciprocal %35 {approx = true} : vector<4x8x1xf32> -> vector<4x8x1xf32>
    %37 = vector.broadcast %36 : vector<4x8x1xf32> to vector<4x8x8xf32>
    %38 = arith.mulf %33, %37 : vector<4x8x8xf32>
    %39 = arith.truncf %38 : vector<4x8x8xf32> to vector<4x8x8xbf16>
    %40 = arith.truncf %25 : vector<4x8x8xf32> to vector<4x8x8xbf16>
    "tpu.trace_start"() <{level = 10 : i32, message = "hqk,hkd->hqd"}> : () -> ()
    %cst_18 = arith.constant dense<0.000000e+00> : vector<4x8x8xf32>
    %41 = tpu.matmul %39, %40, %cst_18 {dimension_numbers = #tpu.dot_dimension_numbers<[2], [1], [1], [2], [0, 0, 0, 1, 1, 2], [0], [0]>} : vector<4x8x8xbf16>, vector<4x8x8xbf16>, vector<4x8x8xf32> -> vector<4x8x8xf32>
    "tpu.trace_stop"() : () -> ()
    %42 = tpu.transpose %41, [1, 0, 2] : vector<4x8x8xf32> -> vector<8x4x8xf32>
    %43 = vector.shape_cast %42 : vector<8x4x8xf32> to vector<8x32xf32>
    %44 = arith.truncf %43 : vector<8x32xf32> to vector<8x32xbf16>
    %c0_19 = arith.constant 0 : index
    %c0_20 = arith.constant 0 : index
    %45 = vector.load %arg8[%c0_19, %c0_20] : memref<32x32xbf16, #tpu.memory_space<vmem>>, vector<32x32xbf16>
    %cst_21 = arith.constant dense<0.000000e+00> : vector<8x32xf32>
    %46 = tpu.matmul %44, %45, %cst_21 {dimension_numbers = #tpu.dot_dimension_numbers<[1], [0], [0], [1], [0, 0, 1, 1], [], []>} : vector<8x32xbf16>, vector<32x32xbf16>, vector<8x32xf32> -> vector<8x32xf32>
    %c0_22 = arith.constant 0 : index
    %c0_23 = arith.constant 0 : index
    %47 = vector.load %arg9[%c0_22, %c0_23] : memref<1x32xf32, #tpu.memory_space<vmem>>, vector<1x32xf32>
    %48 = vector.broadcast %47 : vector<1x32xf32> to vector<8x32xf32>
    %49 = arith.addf %46, %48 : vector<8x32xf32>
    %50 = arith.addf %1, %49 : vector<8x32xf32>
    %cst_24 = arith.constant dense<0.000000e+00> : vector<8xf32>
    %51 = vector.multi_reduction <add>, %50, %cst_24 [1] : vector<8x32xf32> to vector<8xf32>
    %52 = vector.shape_cast %51 : vector<8xf32> to vector<8x1xf32>
    %cst_25 = arith.constant 3.200000e+01 : f32
    %53 = vector.broadcast %cst_25 : f32 to vector<8x1xf32>
    %54 = arith.divf %52, %53 : vector<8x1xf32>
    %55 = vector.broadcast %54 : vector<8x1xf32> to vector<8x32xf32>
    %56 = arith.subf %50, %55 : vector<8x32xf32>
    %57 = arith.mulf %56, %56 : vector<8x32xf32>
    %cst_26 = arith.constant dense<0.000000e+00> : vector<8xf32>
    %58 = vector.multi_reduction <add>, %57, %cst_26 [1] : vector<8x32xf32> to vector<8xf32>
    %59 = vector.shape_cast %58 : vector<8xf32> to vector<8x1xf32>
    %cst_27 = arith.constant 3.200000e+01 : f32
    %60 = vector.broadcast %cst_27 : f32 to vector<8x1xf32>
    %61 = arith.divf %59, %60 : vector<8x1xf32>
    %62 = vector.broadcast %54 : vector<8x1xf32> to vector<8x32xf32>
    %63 = arith.subf %50, %62 : vector<8x32xf32>
    %cst_28 = arith.constant 9.99999974E-6 : f32
    %64 = vector.broadcast %cst_28 : f32 to vector<8x1xf32>
    %65 = arith.addf %61, %64 : vector<8x1xf32>
    %66 = math.rsqrt %65 : vector<8x1xf32>
    %67 = vector.broadcast %66 : vector<8x1xf32> to vector<8x32xf32>
    %68 = arith.mulf %63, %67 : vector<8x32xf32>
    %c0_29 = arith.constant 0 : index
    %c0_30 = arith.constant 0 : index
    %69 = vector.load %arg10[%c0_29, %c0_30] : memref<1x32xf32, #tpu.memory_space<vmem>>, vector<1x32xf32>
    %70 = vector.broadcast %69 : vector<1x32xf32> to vector<8x32xf32>
    %71 = arith.mulf %68, %70 : vector<8x32xf32>
    %c0_31 = arith.constant 0 : index
    %c0_32 = arith.constant 0 : index
    %72 = vector.load %arg11[%c0_31, %c0_32] : memref<1x32xf32, #tpu.memory_space<vmem>>, vector<1x32xf32>
    %73 = vector.broadcast %72 : vector<1x32xf32> to vector<8x32xf32>
    %74 = arith.addf %71, %73 : vector<8x32xf32>
    %75 = arith.truncf %74 : vector<8x32xf32> to vector<8x32xbf16>
    %c0_33 = arith.constant 0 : index
    %c0_34 = arith.constant 0 : index
    %76 = vector.load %arg12[%c0_33, %c0_34] : memref<32x64xbf16, #tpu.memory_space<vmem>>, vector<32x64xbf16>
    %cst_35 = arith.constant dense<0.000000e+00> : vector<8x64xf32>
    %77 = tpu.matmul %75, %76, %cst_35 {dimension_numbers = #tpu.dot_dimension_numbers<[1], [0], [0], [1], [0, 0, 1, 1], [], []>} : vector<8x32xbf16>, vector<32x64xbf16>, vector<8x64xf32> -> vector<8x64xf32>
    %c0_36 = arith.constant 0 : index
    %c0_37 = arith.constant 0 : index
    %78 = vector.load %arg13[%c0_36, %c0_37] : memref<1x64xf32, #tpu.memory_space<vmem>>, vector<1x64xf32>
    %79 = vector.broadcast %78 : vector<1x64xf32> to vector<8x64xf32>
    %80 = arith.addf %77, %79 : vector<8x64xf32>
    %cst_38 = arith.constant 0.000000e+00 : f32
    %81 = vector.broadcast %cst_38 : f32 to vector<8x64xf32>
    %82 = arith.maximumf %80, %81 : vector<8x64xf32>
    %83 = arith.truncf %82 : vector<8x64xf32> to vector<8x64xbf16>
    %c0_39 = arith.constant 0 : index
    %c0_40 = arith.constant 0 : index
    %84 = vector.load %arg14[%c0_39, %c0_40] : memref<64x32xbf16, #tpu.memory_space<vmem>>, vector<64x32xbf16>
    %cst_41 = arith.constant dense<0.000000e+00> : vector<8x32xf32>
    %85 = tpu.matmul %83, %84, %cst_41 {dimension_numbers = #tpu.dot_dimension_numbers<[1], [0], [0], [1], [0, 0, 1, 1], [], []>} : vector<8x64xbf16>, vector<64x32xbf16>, vector<8x32xf32> -> vector<8x32xf32>
    %c0_42 = arith.constant 0 : index
    %c0_43 = arith.constant 0 : index
    %86 = vector.load %arg15[%c0_42, %c0_43] : memref<1x32xf32, #tpu.memory_space<vmem>>, vector<1x32xf32>
    %87 = vector.broadcast %86 : vector<1x32xf32> to vector<8x32xf32>
    %88 = arith.addf %85, %87 : vector<8x32xf32>
    %89 = arith.addf %74, %88 : vector<8x32xf32>
    %cst_44 = arith.constant dense<0.000000e+00> : vector<8xf32>
    %90 = vector.multi_reduction <add>, %89, %cst_44 [1] : vector<8x32xf32> to vector<8xf32>
    %91 = vector.shape_cast %90 : vector<8xf32> to vector<8x1xf32>
    %cst_45 = arith.constant 3.200000e+01 : f32
    %92 = vector.broadcast %cst_45 : f32 to vector<8x1xf32>
    %93 = arith.divf %91, %92 : vector<8x1xf32>
    %94 = vector.broadcast %93 : vector<8x1xf32> to vector<8x32xf32>
    %95 = arith.subf %89, %94 : vector<8x32xf32>
    %96 = arith.mulf %95, %95 : vector<8x32xf32>
    %cst_46 = arith.constant dense<0.000000e+00> : vector<8xf32>
    %97 = vector.multi_reduction <add>, %96, %cst_46 [1] : vector<8x32xf32> to vector<8xf32>
    %98 = vector.shape_cast %97 : vector<8xf32> to vector<8x1xf32>
    %cst_47 = arith.constant 3.200000e+01 : f32
    %99 = vector.broadcast %cst_47 : f32 to vector<8x1xf32>
    %100 = arith.divf %98, %99 : vector<8x1xf32>
    %101 = vector.broadcast %93 : vector<8x1xf32> to vector<8x32xf32>
    %102 = arith.subf %89, %101 : vector<8x32xf32>
    %cst_48 = arith.constant 9.99999974E-6 : f32
    %103 = vector.broadcast %cst_48 : f32 to vector<8x1xf32>
    %104 = arith.addf %100, %103 : vector<8x1xf32>
    %105 = math.rsqrt %104 : vector<8x1xf32>
    %106 = vector.broadcast %105 : vector<8x1xf32> to vector<8x32xf32>
    %107 = arith.mulf %102, %106 : vector<8x32xf32>
    %c0_49 = arith.constant 0 : index
    %c0_50 = arith.constant 0 : index
    %108 = vector.load %arg16[%c0_49, %c0_50] : memref<1x32xf32, #tpu.memory_space<vmem>>, vector<1x32xf32>
    %109 = vector.broadcast %108 : vector<1x32xf32> to vector<8x32xf32>
    %110 = arith.mulf %107, %109 : vector<8x32xf32>
    %c0_51 = arith.constant 0 : index
    %c0_52 = arith.constant 0 : index
    %111 = vector.load %arg17[%c0_51, %c0_52] : memref<1x32xf32, #tpu.memory_space<vmem>>, vector<1x32xf32>
    %112 = vector.broadcast %111 : vector<1x32xf32> to vector<8x32xf32>
    %113 = arith.addf %110, %112 : vector<8x32xf32>
    %c0_53 = arith.constant 0 : index
    %c0_54 = arith.constant 0 : index
    %c0_55 = arith.constant 0 : index
    %114 = vector.load %arg18[%c0_53, %c0_54, %c0_55] : memref<1x8x32xf32, #tpu.memory_space<vmem>>, vector<1x8x32xf32>
    %115 = vector.shape_cast %114 : vector<1x8x32xf32> to vector<8x32xf32>
    %116 = vector.shape_cast %113 : vector<8x32xf32> to vector<1x8x32xf32>
    tpu.vector_store %arg18[%c0_53, %c0_54, %c0_55], %116 {strides = array<i32>} : memref<1x8x32xf32, #tpu.memory_space<vmem>>, vector<1x8x32xf32>,
    return
  }
  func.func @transform_0(%arg0: i32, %arg1: i32) -> (i32, i32, i32) {
    %c0_i32 = arith.constant 0 : i32
    %c0_i32_0 = arith.constant 0 : i32
    return %arg0, %arg1, %c0_i32 : i32, i32, i32
  }
  func.func @transform_1(%arg0: i32, %arg1: i32) -> (i32, i32, i32) {
    %c0_i32 = arith.constant 0 : i32
    %c0_i32_0 = arith.constant 0 : i32
    %c0_i32_1 = arith.constant 0 : i32
    return %arg0, %c0_i32, %c0_i32_0 : i32, i32, i32
  }
  func.func @transform_2(%arg0: i32, %arg1: i32) -> (i32, i32) {
    %c0_i32 = arith.constant 0 : i32
    %c0_i32_0 = arith.constant 0 : i32
    %c0_i32_1 = arith.constant 0 : i32
    return %c0_i32, %c0_i32_0 : i32, i32
  }
  func.func @transform_3(%arg0: i32, %arg1: i32) -> (i32, i32) {
    %c0_i32 = arith.constant 0 : i32
    %c0_i32_0 = arith.constant 0 : i32
    %c0_i32_1 = arith.constant 0 : i32
    return %c0_i32, %c0_i32_0 : i32, i32
  }
  func.func @transform_4(%arg0: i32, %arg1: i32) -> (i32, i32) {
    %c0_i32 = arith.constant 0 : i32
    %c0_i32_0 = arith.constant 0 : i32
    %c0_i32_1 = arith.constant 0 : i32
    return %c0_i32, %c0_i32_0 : i32, i32
  }
  func.func @transform_5(%arg0: i32, %arg1: i32) -> (i32, i32) {
    %c0_i32 = arith.constant 0 : i32
    %c0_i32_0 = arith.constant 0 : i32
    %c0_i32_1 = arith.constant 0 : i32
    return %c0_i32, %c0_i32_0 : i32, i32
  }
  func.func @transform_6(%arg0: i32, %arg1: i32) -> (i32, i32) {
    %c0_i32 = arith.constant 0 : i32
    %c0_i32_0 = arith.constant 0 : i32
    %c0_i32_1 = arith.constant 0 : i32
    return %c0_i32, %c0_i32_0 : i32, i32
  }
  func.func @transform_7(%arg0: i32, %arg1: i32) -> (i32, i32) {
    %c0_i32 = arith.constant 0 : i32
    %c0_i32_0 = arith.constant 0 : i32
    %c0_i32_1 = arith.constant 0 : i32
    return %c0_i32, %c0_i32_0 : i32, i32
  }
  func.func @transform_8(%arg0: i32, %arg1: i32) -> (i32, i32) {
    %c0_i32 = arith.constant 0 : i32
    %c0_i32_0 = arith.constant 0 : i32
    %c0_i32_1 = arith.constant 0 : i32
    return %c0_i32, %c0_i32_0 : i32, i32
  }
  func.func @transform_9(%arg0: i32, %arg1: i32) -> (i32, i32) {
    %c0_i32 = arith.constant 0 : i32
    %c0_i32_0 = arith.constant 0 : i32
    %c0_i32_1 = arith.constant 0 : i32
    return %c0_i32, %c0_i32_0 : i32, i32
  }
  func.func @transform_10(%arg0: i32, %arg1: i32) -> (i32, i32) {
    %c0_i32 = arith.constant 0 : i32
    %c0_i32_0 = arith.constant 0 : i32
    %c0_i32_1 = arith.constant 0 : i32
    return %c0_i32, %c0_i32_0 : i32, i32
  }
  func.func @transform_11(%arg0: i32, %arg1: i32) -> (i32, i32) {
    %c0_i32 = arith.constant 0 : i32
    %c0_i32_0 = arith.constant 0 : i32
    %c0_i32_1 = arith.constant 0 : i32
    return %c0_i32, %c0_i32_0 : i32, i32
  }
  func.func @transform_12(%arg0: i32, %arg1: i32) -> (i32, i32) {
    %c0_i32 = arith.constant 0 : i32
    %c0_i32_0 = arith.constant 0 : i32
    %c0_i32_1 = arith.constant 0 : i32
    return %c0_i32, %c0_i32_0 : i32, i32
  }
  func.func @transform_13(%arg0: i32, %arg1: i32) -> (i32, i32) {
    %c0_i32 = arith.constant 0 : i32
    %c0_i32_0 = arith.constant 0 : i32
    %c0_i32_1 = arith.constant 0 : i32
    return %c0_i32, %c0_i32_0 : i32, i32
  }
  func.func @transform_14(%arg0: i32, %arg1: i32) -> (i32, i32) {
    %c0_i32 = arith.constant 0 : i32
    %c0_i32_0 = arith.constant 0 : i32
    %c0_i32_1 = arith.constant 0 : i32
    return %c0_i32, %c0_i32_0 : i32, i32
  }
  func.func @transform_15(%arg0: i32, %arg1: i32) -> (i32, i32) {
    %c0_i32 = arith.constant 0 : i32
    %c0_i32_0 = arith.constant 0 : i32
    %c0_i32_1 = arith.constant 0 : i32
    return %c0_i32, %c0_i32_0 : i32, i32
  }
  func.func @transform_16(%arg0: i32, %arg1: i32) -> (i32, i32, i32) {
    %c0_i32 = arith.constant 0 : i32
    %c0_i32_0 = arith.constant 0 : i32
    return %arg0, %arg1, %c0_i32 : i32, i32, i32
  }
}

</mosaic_0001>

<llo_original>
// kernel: tpu_custom_call.1
$region0: #{tpu_custom_call.1}
  #allocation0 [shape = 'u32[]', space=smem, size = 0x4, offset = 0x4, fixed_abs, tag = 'smem constant byte address 0x4 - core index']
  #allocation1 [shape = 'u32[72,128]{1,0:T(1,128)}', space=vmem, size = 0x9000, scoped, tag = 'internal scratch']
  %s0 = inlined_call_operand.vmem [shape: f32[2,8,32], index: 0, kind: input, shape index: {}]
  %s1 = inlined_call_operand.vmem [shape: f32[2,8,32], index: 1, kind: input, shape index: {}]
  %s2 = inlined_call_operand.vmem [shape: bf16[32,32], index: 2, kind: input, shape index: {}]
  %s3 = inlined_call_operand.vmem [shape: f32[1,32], index: 3, kind: input, shape index: {}]
  %s4 = inlined_call_operand.hbm [shape: bf16[32,64], index: 4, kind: input, shape index: {}]
  %s5 = inlined_call_operand.vmem [shape: f32[1,64], index: 5, kind: input, shape index: {}]
  %s6 = inlined_call_operand.hbm [shape: bf16[32,32], index: 6, kind: input, shape index: {}]
  %s7 = inlined_call_operand.vmem [shape: f32[1,32], index: 7, kind: input, shape index: {}]
  %s8 = inlined_call_operand.vmem [shape: f32[1,32], index: 8, kind: input, shape index: {}]
  %s9 = inlined_call_operand.vmem [shape: f32[1,32], index: 9, kind: input, shape index: {}]
  %s10 = inlined_call_operand.hbm [shape: bf16[32,64], index: 10, kind: input, shape index: {}]
  %s11 = inlined_call_operand.vmem [shape: f32[1,64], index: 11, kind: input, shape index: {}]
  %s12 = inlined_call_operand.vmem [shape: bf16[64,32], index: 12, kind: input, shape index: {}]
  %s13 = inlined_call_operand.vmem [shape: f32[1,32], index: 13, kind: input, shape index: {}]
  %s14 = inlined_call_operand.vmem [shape: f32[1,32], index: 14, kind: input, shape index: {}]
  %s15 = inlined_call_operand.vmem [shape: f32[1,32], index: 15, kind: input, shape index: {}]
  %s16 = inlined_call_operand.hbm [shape: f32[2,8,32], index: 16, kind: output, shape index: {}]
  %s17 = sld [smem:[#allocation0]]
  $region109: #{tpu_custom_call.1} parent=0
    _
  %s19 = ssub.s32 1, %s17
  %s20 = scalar_select 0, %s19, %s17
  $region1: #{tpu_custom_call.1} parent=0
    #allocation2 [shape = 'u8[8192]{0}', space=vmem, size = 0x2000, scoped, tag = 'input window, operand 4, single buffered']
    #allocation3 [shape = 's32[2]{0}', space=sflag, size = 0x8, scoped, tag = 'scoped memory for tpu_custom_call.1']
    #allocation4 [shape = 's32[2]{0}', space=sflag, size = 0x8, scoped, tag = 'scoped memory for tpu_custom_call.1']
    #allocation5 [shape = 'u8[8192]{0}', space=vmem, size = 0x2000, scoped, tag = 'input window, operand 6, single buffered']
    #allocation6 [shape = 's32[1]{0}', space=sflag, size = 0x4, scoped, tag = 'scoped memory for tpu_custom_call.1']
    #allocation7 [shape = 'u8[8192]{0}', space=vmem, size = 0x2000, scoped, tag = 'input window, operand 10, single buffered']
    #allocation8 [shape = 'u8[8192]{0}', space=vmem, size = 0x2000, scoped, tag = 'output window, operand 0']
    %21 = vsyncpa [#allocation3], 0
    %22 = vsyncpa [#allocation6], 0
    %23 = vsyncpa [#allocation4], 0
    %s24 = scalar_lea.sflag [#allocation4], 1
    %25 = vsyncpa %s24, 0
    loop: start=0, step=1, limit=4
    $region2: #{tpu_custom_call.1} parent=1 // loop_pre_header
      _
    $region3: #{tpu_custom_call.1} parent=1 // loop_header
      %s27 = sphi 0, %s31
      %p28 = scmp.ge.s32.totalorder %s27, 4
      %s34 = sphi 0, %s46
      %s35 = sphi 0, %s42
      %s36 = sphi 0, %s34
      %s37 = sphi 0, %s35
      %s38 = sphi 0, %s36
      %s39 = sphi 0, %s37
      %s51 = sphi 0, %s53
      %s54 = sphi 0, %s51
      %s55 = sphi 0, %s54
      %s71 = sphi 0, %s55
      %s77 = sphi 0, %s79
      %s80 = sphi 0, %s77
      %s81 = sphi 0, %s80
      %s97 = sphi 0, %s81
      %s101 = sphi 0, %s101
      %s103 = sphi 0, %s101
      %s104 = sphi 0, %s103
      %s118 = sphi 0, %s104
      %s122 = sphi 0, %s122
      %s124 = sphi 0, %s122
      %s125 = sphi 0, %s124
      %s139 = sphi 0, %s125
      %s143 = sphi 0, %s143
      %s145 = sphi 0, %s143
      %s146 = sphi 0, %s145
      %s160 = sphi 0, %s146
      %s164 = sphi 0, %s164
      %s166 = sphi 0, %s164
      %s167 = sphi 0, %s166
      %s181 = sphi 0, %s167
      %s185 = sphi 0, %s185
      %s187 = sphi 0, %s185
      %s188 = sphi 0, %s187
      %s202 = sphi 0, %s188
      %s206 = sphi 0, %s206
      %s208 = sphi 0, %s206
      %s209 = sphi 0, %s208
      %s223 = sphi 0, %s209
      %s227 = sphi 0, %s227
      %s229 = sphi 0, %s227
      %s230 = sphi 0, %s229
      %s244 = sphi 0, %s230
      %s248 = sphi 0, %s248
      %s250 = sphi 0, %s248
      %s251 = sphi 0, %s250
      %s265 = sphi 0, %s251
      %s269 = sphi 0, %s269
      %s271 = sphi 0, %s269
      %s272 = sphi 0, %s271
      %s286 = sphi 0, %s272
      %s290 = sphi 0, %s290
      %s292 = sphi 0, %s290
      %s293 = sphi 0, %s292
      %s307 = sphi 0, %s293
      %s311 = sphi 0, %s311
      %s313 = sphi 0, %s311
      %s314 = sphi 0, %s313
      %s328 = sphi 0, %s314
      %s332 = sphi 0, %s332
      %s334 = sphi 0, %s332
      %s335 = sphi 0, %s334
      %s349 = sphi 0, %s335
      %s353 = sphi 0, %s353
      %s355 = sphi 0, %s353
      %s356 = sphi 0, %s355
      %s370 = sphi 0, %s356
      %s374 = sphi 0, %s374
      %s376 = sphi 0, %s374
      %s377 = sphi 0, %s376
      %s391 = sphi 0, %s377
      %s399 = sphi 0, %s401
      %s402 = sphi 0, %s399
      %s403 = sphi 0, %s402
      %s419 = sphi 0, %s403
    $region4: #{tpu_custom_call.1} parent=1 // loop_header_branch
      %30 = sbr.rel (%p28) target = $region8
    $region5: #{tpu_custom_call.1} parent=1 // loop_body
      %s32 = ssub.s32 %s27, 1
      %s33 = ssub.s32 %s27, 2
      %s40 = sadd.s32 1, %s35
      %p41 = scmp.ge.s32.totalorder %s40, 1
      %s42 = scalar_select %p41, 0, %s40
      %s43 = sadd.s32 1, %s34
      %s44 = scalar_select %p41, %s43, %s34
      %p45 = scmp.ge.s32.totalorder %s44, 2
      %s46 = scalar_select %p45, 0, %s44
      %s47 = ssub.s32 %s34, %s46
      %s48 = ssub.s32 %s35, %s42
      %s49 = sor.u32 %s47, %s48
      %p50 = scmp.eq.s32.totalorder %s49, 0
      %s52 = sadd.s32 %s51, 1
      %s53 = scalar_select %p50, %s51, %s52
      %p56 = pneg %p50
      %p57 = scmp.eq.s32.totalorder %s27, 1
      %p58 = por %p56, %p57
      %p59 = scmp.ne.s32.totalorder %s51, %s54
      %p60 = scmp.eq.s32.totalorder %s27, 0
      %p61 = por %p59, %p60
      %p62 = scmp.ne.s32.totalorder %s51, %s54
      %p63 = scmp.eq.s32.totalorder %s32, 1
      %p64 = por %p62, %p63
      %p65 = scmp.ne.s32.totalorder %s54, %s55
      %p66 = scmp.eq.s32.totalorder %s32, 0
      %p67 = por %p65, %p66
      %p68 = scmp.ne.s32.totalorder %s54, %s55
      %p69 = scmp.eq.s32.totalorder %s33, 1
      %p70 = por %p68, %p69
      %p72 = scmp.ne.s32.totalorder %s55, %s71
      %p73 = scmp.eq.s32.totalorder %s33, 0
      %p74 = por %p72, %p73
      %s75 = ssub.s32 %s34, %s46
      %p76 = scmp.eq.s32.totalorder %s75, 0
      %s78 = sadd.s32 %s77, 1
      %s79 = scalar_select %p76, %s77, %s78
      %p82 = pneg %p76
      %p83 = scmp.eq.s32.totalorder %s27, 1
      %p84 = por %p82, %p83
      %p85 = scmp.ne.s32.totalorder %s77, %s80
      %p86 = scmp.eq.s32.totalorder %s27, 0
      %p87 = por %p85, %p86
      %p88 = scmp.ne.s32.totalorder %s77, %s80
      %p89 = scmp.eq.s32.totalorder %s32, 1
      %p90 = por %p88, %p89
      %p91 = scmp.ne.s32.totalorder %s80, %s81
      %p92 = scmp.eq.s32.totalorder %s32, 0
      %p93 = por %p91, %p92
      %p94 = scmp.ne.s32.totalorder %s80, %s81
      %p95 = scmp.eq.s32.totalorder %s33, 1
      %p96 = por %p94, %p95
      %p98 = scmp.ne.s32.totalorder %s81, %s97
      %p99 = scmp.eq.s32.totalorder %s33, 0
      %p100 = por %p98, %p99
      %s102 = sadd.s32 %s101, 1
      %p105 = scmp.eq.s32.totalorder %s27, 1
      %p106 = scmp.ne.s32.totalorder %s101, %s103
      %p107 = scmp.eq.s32.totalorder %s27, 0
      %p108 = por %p106, %p107
      %p109 = scmp.ne.s32.totalorder %s101, %s103
      %p110 = scmp.eq.s32.totalorder %s32, 1
      %p111 = por %p109, %p110
      %p112 = scmp.ne.s32.totalorder %s103, %s104
      %p113 = scmp.eq.s32.totalorder %s32, 0
      %p114 = por %p112, %p113
      %p115 = scmp.ne.s32.totalorder %s103, %s104
      %p116 = scmp.eq.s32.totalorder %s33, 1
      %p117 = por %p115, %p116
      %p119 = scmp.ne.s32.totalorder %s104, %s118
      %p120 = scmp.eq.s32.totalorder %s33, 0
      %p121 = por %p119, %p120
      %s123 = sadd.s32 %s122, 1
      %p126 = scmp.eq.s32.totalorder %s27, 1
      %p127 = scmp.ne.s32.totalorder %s122, %s124
      %p128 = scmp.eq.s32.totalorder %s27, 0
      %p129 = por %p127, %p128
      %p130 = scmp.ne.s32.totalorder %s122, %s124
      %p131 = scmp.eq.s32.totalorder %s32, 1
      %p132 = por %p130, %p131
      %p133 = scmp.ne.s32.totalorder %s124, %s125
      %p134 = scmp.eq.s32.totalorder %s32, 0
      %p135 = por %p133, %p134
      %p136 = scmp.ne.s32.totalorder %s124, %s125
      %p137 = scmp.eq.s32.totalorder %s33, 1
      %p138 = por %p136, %p137
      %p140 = scmp.ne.s32.totalorder %s125, %s139
      %p141 = scmp.eq.s32.totalorder %s33, 0
      %p142 = por %p140, %p141
      %s144 = sadd.s32 %s143, 1
      %p147 = scmp.eq.s32.totalorder %s27, 1
      %p148 = scmp.ne.s32.totalorder %s143, %s145
      %p149 = scmp.eq.s32.totalorder %s27, 0
      %p150 = por %p148, %p149
      %p151 = scmp.ne.s32.totalorder %s143, %s145
      %p152 = scmp.eq.s32.totalorder %s32, 1
      %p153 = por %p151, %p152
      %p154 = scmp.ne.s32.totalorder %s145, %s146
      %p155 = scmp.eq.s32.totalorder %s32, 0
      %p156 = por %p154, %p155
      %p157 = scmp.ne.s32.totalorder %s145, %s146
      %p158 = scmp.eq.s32.totalorder %s33, 1
      %p159 = por %p157, %p158
      %p161 = scmp.ne.s32.totalorder %s146, %s160
      %p162 = scmp.eq.s32.totalorder %s33, 0
      %p163 = por %p161, %p162
      %s165 = sadd.s32 %s164, 1
      %p168 = scmp.eq.s32.totalorder %s27, 1
      %p169 = scmp.ne.s32.totalorder %s164, %s166
      %p170 = scmp.eq.s32.totalorder %s27, 0
      %p171 = por %p169, %p170
      %p172 = scmp.ne.s32.totalorder %s164, %s166
      %p173 = scmp.eq.s32.totalorder %s32, 1
      %p174 = por %p172, %p173
      %p175 = scmp.ne.s32.totalorder %s166, %s167
      %p176 = scmp.eq.s32.totalorder %s32, 0
      %p177 = por %p175, %p176
      %p178 = scmp.ne.s32.totalorder %s166, %s167
      %p179 = scmp.eq.s32.totalorder %s33, 1
      %p180 = por %p178, %p179
      %p182 = scmp.ne.s32.totalorder %s167, %s181
      %p183 = scmp.eq.s32.totalorder %s33, 0
      %p184 = por %p182, %p183
      %s186 = sadd.s32 %s185, 1
      %p189 = scmp.eq.s32.totalorder %s27, 1
      %p190 = scmp.ne.s32.totalorder %s185, %s187
      %p191 = scmp.eq.s32.totalorder %s27, 0
      %p192 = por %p190, %p191
      %p193 = scmp.ne.s32.totalorder %s185, %s187
      %p194 = scmp.eq.s32.totalorder %s32, 1
      %p195 = por %p193, %p194
      %p196 = scmp.ne.s32.totalorder %s187, %s188
      %p197 = scmp.eq.s32.totalorder %s32, 0
      %p198 = por %p196, %p197
      %p199 = scmp.ne.s32.totalorder %s187, %s188
      %p200 = scmp.eq.s32.totalorder %s33, 1
      %p201 = por %p199, %p200
      %p203 = scmp.ne.s32.totalorder %s188, %s202
      %p204 = scmp.eq.s32.totalorder %s33, 0
      %p205 = por %p203, %p204
      %s207 = sadd.s32 %s206, 1
      %p210 = scmp.eq.s32.totalorder %s27, 1
      %p211 = scmp.ne.s32.totalorder %s206, %s208
      %p212 = scmp.eq.s32.totalorder %s27, 0
      %p213 = por %p211, %p212
      %p214 = scmp.ne.s32.totalorder %s206, %s208
      %p215 = scmp.eq.s32.totalorder %s32, 1
      %p216 = por %p214, %p215
      %p217 = scmp.ne.s32.totalorder %s208, %s209
      %p218 = scmp.eq.s32.totalorder %s32, 0
      %p219 = por %p217, %p218
      %p220 = scmp.ne.s32.totalorder %s208, %s209
      %p221 = scmp.eq.s32.totalorder %s33, 1
      %p222 = por %p220, %p221
      %p224 = scmp.ne.s32.totalorder %s209, %s223
      %p225 = scmp.eq.s32.totalorder %s33, 0
      %p226 = por %p224, %p225
      %s228 = sadd.s32 %s227, 1
      %p231 = scmp.eq.s32.totalorder %s27, 1
      %p232 = scmp.ne.s32.totalorder %s227, %s229
      %p233 = scmp.eq.s32.totalorder %s27, 0
      %p234 = por %p232, %p233
      %p235 = scmp.ne.s32.totalorder %s227, %s229
      %p236 = scmp.eq.s32.totalorder %s32, 1
      %p237 = por %p235, %p236
      %p238 = scmp.ne.s32.totalorder %s229, %s230
      %p239 = scmp.eq.s32.totalorder %s32, 0
      %p240 = por %p238, %p239
      %p241 = scmp.ne.s32.totalorder %s229, %s230
      %p242 = scmp.eq.s32.totalorder %s33, 1
      %p243 = por %p241, %p242
      %p245 = scmp.ne.s32.totalorder %s230, %s244
      %p246 = scmp.eq.s32.totalorder %s33, 0
      %p247 = por %p245, %p246
      %s249 = sadd.s32 %s248, 1
      %p252 = scmp.eq.s32.totalorder %s27, 1
      %p253 = scmp.ne.s32.totalorder %s248, %s250
      %p254 = scmp.eq.s32.totalorder %s27, 0
      %p255 = por %p253, %p254
      %p256 = scmp.ne.s32.totalorder %s248, %s250
      %p257 = scmp.eq.s32.totalorder %s32, 1
      %p258 = por %p256, %p257
      %p259 = scmp.ne.s32.totalorder %s250, %s251
      %p260 = scmp.eq.s32.totalorder %s32, 0
      %p261 = por %p259, %p260
      %p262 = scmp.ne.s32.totalorder %s250, %s251
      %p263 = scmp.eq.s32.totalorder %s33, 1
      %p264 = por %p262, %p263
      %p266 = scmp.ne.s32.totalorder %s251, %s265
      %p267 = scmp.eq.s32.totalorder %s33, 0
      %p268 = por %p266, %p267
      %s270 = sadd.s32 %s269, 1
      %p273 = scmp.eq.s32.totalorder %s27, 1
      %p274 = scmp.ne.s32.totalorder %s269, %s271
      %p275 = scmp.eq.s32.totalorder %s27, 0
      %p276 = por %p274, %p275
      %p277 = scmp.ne.s32.totalorder %s269, %s271
      %p278 = scmp.eq.s32.totalorder %s32, 1
      %p279 = por %p277, %p278
      %p280 = scmp.ne.s32.totalorder %s271, %s272
      %p281 = scmp.eq.s32.totalorder %s32, 0
      %p282 = por %p280, %p281
      %p283 = scmp.ne.s32.totalorder %s271, %s272
      %p284 = scmp.eq.s32.totalorder %s33, 1
      %p285 = por %p283, %p284
      %p287 = scmp.ne.s32.totalorder %s272, %s286
      %p288 = scmp.eq.s32.totalorder %s33, 0
      %p289 = por %p287, %p288
      %s291 = sadd.s32 %s290, 1
      %p294 = scmp.eq.s32.totalorder %s27, 1
      %p295 = scmp.ne.s32.totalorder %s290, %s292
      %p296 = scmp.eq.s32.totalorder %s27, 0
      %p297 = por %p295, %p296
      %p298 = scmp.ne.s32.totalorder %s290, %s292
      %p299 = scmp.eq.s32.totalorder %s32, 1
      %p300 = por %p298, %p299
      %p301 = scmp.ne.s32.totalorder %s292, %s293
      %p302 = scmp.eq.s32.totalorder %s32, 0
      %p303 = por %p301, %p302
      %p304 = scmp.ne.s32.totalorder %s292, %s293
      %p305 = scmp.eq.s32.totalorder %s33, 1
      %p306 = por %p304, %p305
      %p308 = scmp.ne.s32.totalorder %s293, %s307
      %p309 = scmp.eq.s32.totalorder %s33, 0
      %p310 = por %p308, %p309
      %s312 = sadd.s32 %s311, 1
      %p315 = scmp.eq.s32.totalorder %s27, 1
      %p316 = scmp.ne.s32.totalorder %s311, %s313
      %p317 = scmp.eq.s32.totalorder %s27, 0
      %p318 = por %p316, %p317
      %p319 = scmp.ne.s32.totalorder %s311, %s313
      %p320 = scmp.eq.s32.totalorder %s32, 1
      %p321 = por %p319, %p320
      %p322 = scmp.ne.s32.totalorder %s313, %s314
      %p323 = scmp.eq.s32.totalorder %s32, 0
      %p324 = por %p322, %p323
      %p325 = scmp.ne.s32.totalorder %s313, %s314
      %p326 = scmp.eq.s32.totalorder %s33, 1
      %p327 = por %p325, %p326
      %p329 = scmp.ne.s32.totalorder %s314, %s328
      %p330 = scmp.eq.s32.totalorder %s33, 0
      %p331 = por %p329, %p330
      %s333 = sadd.s32 %s332, 1
      %p336 = scmp.eq.s32.totalorder %s27, 1
      %p337 = scmp.ne.s32.totalorder %s332, %s334
      %p338 = scmp.eq.s32.totalorder %s27, 0
      %p339 = por %p337, %p338
      %p340 = scmp.ne.s32.totalorder %s332, %s334
      %p341 = scmp.eq.s32.totalorder %s32, 1
      %p342 = por %p340, %p341
      %p343 = scmp.ne.s32.totalorder %s334, %s335
      %p344 = scmp.eq.s32.totalorder %s32, 0
      %p345 = por %p343, %p344
      %p346 = scmp.ne.s32.totalorder %s334, %s335
      %p347 = scmp.eq.s32.totalorder %s33, 1
      %p348 = por %p346, %p347
      %p350 = scmp.ne.s32.totalorder %s335, %s349
      %p351 = scmp.eq.s32.totalorder %s33, 0
      %p352 = por %p350, %p351
      %s354 = sadd.s32 %s353, 1
      %p357 = scmp.eq.s32.totalorder %s27, 1
      %p358 = scmp.ne.s32.totalorder %s353, %s355
      %p359 = scmp.eq.s32.totalorder %s27, 0
      %p360 = por %p358, %p359
      %p361 = scmp.ne.s32.totalorder %s353, %s355
      %p362 = scmp.eq.s32.totalorder %s32, 1
      %p363 = por %p361, %p362
      %p364 = scmp.ne.s32.totalorder %s355, %s356
      %p365 = scmp.eq.s32.totalorder %s32, 0
      %p366 = por %p364, %p365
      %p367 = scmp.ne.s32.totalorder %s355, %s356
      %p368 = scmp.eq.s32.totalorder %s33, 1
      %p369 = por %p367, %p368
      %p371 = scmp.ne.s32.totalorder %s356, %s370
      %p372 = scmp.eq.s32.totalorder %s33, 0
      %p373 = por %p371, %p372
      %s375 = sadd.s32 %s374, 1
      %p378 = scmp.eq.s32.totalorder %s27, 1
      %p379 = scmp.ne.s32.totalorder %s374, %s376
      %p380 = scmp.eq.s32.totalorder %s27, 0
      %p381 = por %p379, %p380
      %p382 = scmp.ne.s32.totalorder %s374, %s376
      %p383 = scmp.eq.s32.totalorder %s32, 1
      %p384 = por %p382, %p383
      %p385 = scmp.ne.s32.totalorder %s376, %s377
      %p386 = scmp.eq.s32.totalorder %s32, 0
      %p387 = por %p385, %p386
      %p388 = scmp.ne.s32.totalorder %s376, %s377
      %p389 = scmp.eq.s32.totalorder %s33, 1
      %p390 = por %p388, %p389
      %p392 = scmp.ne.s32.totalorder %s377, %s391
      %p393 = scmp.eq.s32.totalorder %s33, 0
      %p394 = por %p392, %p393
      %s395 = ssub.s32 %s34, %s46
      %s396 = ssub.s32 %s35, %s42
      %s397 = sor.u32 %s395, %s396
      %p398 = scmp.eq.s32.totalorder %s397, 0
      %s400 = sadd.s32 %s399, 1
      %s401 = scalar_select %p398, %s399, %s400
      %p404 = pneg %p398
      %p405 = scmp.eq.s32.totalorder %s27, 1
      %p406 = por %p404, %p405
      %p407 = scmp.ne.s32.totalorder %s399, %s402
      %p408 = scmp.eq.s32.totalorder %s27, 0
      %p409 = por %p407, %p408
      %p410 = scmp.ne.s32.totalorder %s399, %s402
      %p411 = scmp.eq.s32.totalorder %s32, 1
      %p412 = por %p410, %p411
      %p413 = scmp.ne.s32.totalorder %s402, %s403
      %p414 = scmp.eq.s32.totalorder %s32, 0
      %p415 = por %p413, %p414
      %p416 = scmp.ne.s32.totalorder %s402, %s403
      %p417 = scmp.eq.s32.totalorder %s33, 1
      %p418 = por %p416, %p417
      %p420 = scmp.ne.s32.totalorder %s403, %s419
      %p421 = scmp.eq.s32.totalorder %s33, 0
      %p422 = por %p420, %p421
      %p423 = scmp.le.s32.totalorder 1, %s27
      %p424 = scmp.lt.s32.totalorder %s27, 3
      %p425 = pnand %p423, %p424
      %p426 = pneg %p425
      // Predicated region
      $region9: #{tpu_custom_call.1} parent=5 // pred_check
        _
      $region10: #{tpu_custom_call.1} parent=5 // pred_check_branch
        %428 = sbr.rel (%p425) target = $region12
      $region11: #{tpu_custom_call.1} parent=5 // pred_region
        %s429 = ssub.s32 %s27, 1
        // Predicated region
        $region13: #{tpu_custom_call.1} parent=11 // pred_check
          %p430 = pneg %p114
        $region14: #{tpu_custom_call.1} parent=11 // pred_check_branch
          %432 = sbr.rel (%p430) target = $region16
        $region15: #{tpu_custom_call.1} parent=11 // pred_region
          _
        $region16: #{tpu_custom_call.1} parent=11 // pred_fallthru
          _
        // Predicated region
        $region17: #{tpu_custom_call.1} parent=11 // pred_check
          %p433 = pneg %p135
        $region18: #{tpu_custom_call.1} parent=11 // pred_check_branch
          %435 = sbr.rel (%p433) target = $region20
        $region19: #{tpu_custom_call.1} parent=11 // pred_region
          _
        $region20: #{tpu_custom_call.1} parent=11 // pred_fallthru
          _
        // Predicated region
        $region21: #{tpu_custom_call.1} parent=11 // pred_check
          %p436 = pneg %p156
        $region22: #{tpu_custom_call.1} parent=11 // pred_check_branch
          %438 = sbr.rel (%p436) target = $region24
        $region23: #{tpu_custom_call.1} parent=11 // pred_region
          %440 = vsyncadd [#allocation3], 0
          %s441 = sshll.u32 %s4, 4
          %s442 = int_to_ptr.hbm [resolvable:$true] %s441
          %s443 = sshll.u32 [#allocation2], 4
          %s444 = int_to_ptr.vmem [resolvable:$true] %s443
          %449 = dma.hbm_to_vmem [thread:$0]  %s442, 256, %s444, [#allocation3], 64, 64, 4
        $region24: #{tpu_custom_call.1} parent=11 // pred_fallthru
          _
        // Predicated region
        $region25: #{tpu_custom_call.1} parent=11 // pred_check
          %p450 = pneg %p177
        $region26: #{tpu_custom_call.1} parent=11 // pred_check_branch
          %452 = sbr.rel (%p450) target = $region28
        $region27: #{tpu_custom_call.1} parent=11 // pred_region
          _
        $region28: #{tpu_custom_call.1} parent=11 // pred_fallthru
          _
        // Predicated region
        $region29: #{tpu_custom_call.1} parent=11 // pred_check
          %p453 = pneg %p198
        $region30: #{tpu_custom_call.1} parent=11 // pred_check_branch
          %455 = sbr.rel (%p453) target = $region32
        $region31: #{tpu_custom_call.1} parent=11 // pred_region
          %457 = vsyncadd [#allocation6], 0
          %s458 = sshll.u32 %s6, 4
          %s459 = int_to_ptr.hbm [resolvable:$true] %s458
          %s460 = sshll.u32 [#allocation5], 4
          %s461 = int_to_ptr.vmem [resolvable:$true] %s460
          %466 = dma.hbm_to_vmem [thread:$0]  %s459, 256, %s461, [#allocation6], 64, 64, 4
        $region32: #{tpu_custom_call.1} parent=11 // pred_fallthru
          _
        // Predicated region
        $region33: #{tpu_custom_call.1} parent=11 // pred_check
          %p467 = pneg %p219
        $region34: #{tpu_custom_call.1} parent=11 // pred_check_branch
          %469 = sbr.rel (%p467) target = $region36
        $region35: #{tpu_custom_call.1} parent=11 // pred_region
          _
        $region36: #{tpu_custom_call.1} parent=11 // pred_fallthru
          _
        // Predicated region
        $region37: #{tpu_custom_call.1} parent=11 // pred_check
          %p470 = pneg %p240
        $region38: #{tpu_custom_call.1} parent=11 // pred_check_branch
          %472 = sbr.rel (%p470) target = $region40
        $region39: #{tpu_custom_call.1} parent=11 // pred_region
          _
        $region40: #{tpu_custom_call.1} parent=11 // pred_fallthru
          _
        // Predicated region
        $region41: #{tpu_custom_call.1} parent=11 // pred_check
          %p473 = pneg %p261
        $region42: #{tpu_custom_call.1} parent=11 // pred_check_branch
          %475 = sbr.rel (%p473) target = $region44
        $region43: #{tpu_custom_call.1} parent=11 // pred_region
          _
        $region44: #{tpu_custom_call.1} parent=11 // pred_fallthru
          _
        // Predicated region
        $region45: #{tpu_custom_call.1} parent=11 // pred_check
          %p476 = pneg %p282
        $region46: #{tpu_custom_call.1} parent=11 // pred_check_branch
          %478 = sbr.rel (%p476) target = $region48
        $region47: #{tpu_custom_call.1} parent=11 // pred_region
          %480 = vsyncadd [#allocation6], 0
          %s481 = sshll.u32 %s10, 4
          %s482 = int_to_ptr.hbm [resolvable:$true] %s481
          %s483 = sshll.u32 [#allocation7], 4
          %s484 = int_to_ptr.vmem [resolvable:$true] %s483
          %489 = dma.hbm_to_vmem [thread:$0]  %s482, 256, %s484, [#allocation6], 64, 64, 4
        $region48: #{tpu_custom_call.1} parent=11 // pred_fallthru
          _
        // Predicated region
        $region49: #{tpu_custom_call.1} parent=11 // pred_check
          %p490 = pneg %p303
        $region50: #{tpu_custom_call.1} parent=11 // pred_check_branch
          %492 = sbr.rel (%p490) target = $region52
        $region51: #{tpu_custom_call.1} parent=11 // pred_region
          _
        $region52: #{tpu_custom_call.1} parent=11 // pred_fallthru
          _
        // Predicated region
        $region53: #{tpu_custom_call.1} parent=11 // pred_check
          %p493 = pneg %p324
        $region54: #{tpu_custom_call.1} parent=11 // pred_check_branch
          %495 = sbr.rel (%p493) target = $region56
        $region55: #{tpu_custom_call.1} parent=11 // pred_region
          _
        $region56: #{tpu_custom_call.1} parent=11 // pred_fallthru
          _
        // Predicated region
        $region57: #{tpu_custom_call.1} parent=11 // pred_check
          %p496 = pneg %p345
        $region58: #{tpu_custom_call.1} parent=11 // pred_check_branch
          %498 = sbr.rel (%p496) target = $region60
        $region59: #{tpu_custom_call.1} parent=11 // pred_region
          _
        $region60: #{tpu_custom_call.1} parent=11 // pred_fallthru
          _
        // Predicated region
        $region61: #{tpu_custom_call.1} parent=11 // pred_check
          %p499 = pneg %p366
        $region62: #{tpu_custom_call.1} parent=11 // pred_check_branch
          %501 = sbr.rel (%p499) target = $region64
        $region63: #{tpu_custom_call.1} parent=11 // pred_region
          _
        $region64: #{tpu_custom_call.1} parent=11 // pred_fallthru
          _
        // Predicated region
        $region65: #{tpu_custom_call.1} parent=11 // pred_check
          %p502 = pneg %p387
        $region66: #{tpu_custom_call.1} parent=11 // pred_check_branch
          %504 = sbr.rel (%p502) target = $region68
        $region67: #{tpu_custom_call.1} parent=11 // pred_region
          _
        $region68: #{tpu_custom_call.1} parent=11 // pred_fallthru
          _
      $region12: #{tpu_custom_call.1} parent=5 // pred_fallthru
        _
      %p505 = scmp.lt.s32.totalorder %s27, 2
      // Predicated region
      $region69: #{tpu_custom_call.1} parent=5 // pred_check
        %p506 = pneg %p505
      $region70: #{tpu_custom_call.1} parent=5 // pred_check_branch
        %508 = sbr.rel (%p506) target = $region72
      $region71: #{tpu_custom_call.1} parent=5 // pred_region
        // Predicated region
        $region73: #{tpu_custom_call.1} parent=71 // pred_check
          %p509 = pneg %p61
        $region74: #{tpu_custom_call.1} parent=71 // pred_check_branch
          %511 = sbr.rel (%p509) target = $region76
        $region75: #{tpu_custom_call.1} parent=71 // pred_region
          %p512 = scmp.lt.s32.totalorder %s34, 1
          %s513 = scalar_select %p512, %s34, 1
          %p514 = scmp.lt.s32.totalorder %s35, 0
          %s515 = scalar_select %p514, %s35, 0
          %s516 = sadd.s32 %s515, %s513
          %s517 = smul.addr %s516, 8
          %s518 = scalar_lea.vmem %s0, %s517
        $region76: #{tpu_custom_call.1} parent=71 // pred_fallthru
          _
        // Predicated region
        $region77: #{tpu_custom_call.1} parent=71 // pred_check
          %p519 = pneg %p87
        $region78: #{tpu_custom_call.1} parent=71 // pred_check_branch
          %521 = sbr.rel (%p519) target = $region80
        $region79: #{tpu_custom_call.1} parent=71 // pred_region
          %p522 = scmp.lt.s32.totalorder %s34, 1
          %s523 = scalar_select %p522, %s34, 1
          %s524 = smul.addr %s523, 8
          %s525 = scalar_lea.vmem %s1, %s524
        $region80: #{tpu_custom_call.1} parent=71 // pred_fallthru
          _
      $region72: #{tpu_custom_call.1} parent=5 // pred_fallthru
        _
      %p526 = scmp.le.s32.totalorder 1, %s27
      %p527 = scmp.lt.s32.totalorder %s27, 3
      %p528 = pnand %p526, %p527
      %p529 = pneg %p528
      // Predicated region
      $region81: #{tpu_custom_call.1} parent=5 // pred_check
        _
      $region82: #{tpu_custom_call.1} parent=5 // pred_check_branch
        %531 = sbr.rel (%p528) target = $region84
      $region83: #{tpu_custom_call.1} parent=5 // pred_region
        %s532 = ssub.s32 %s27, 1
        // Predicated region
        $region85: #{tpu_custom_call.1} parent=83 // pred_check
          %p533 = pneg %p156
        $region86: #{tpu_custom_call.1} parent=83 // pred_check_branch
          %535 = sbr.rel (%p533) target = $region88
        $region87: #{tpu_custom_call.1} parent=83 // pred_region
          %537 = dma.done [#allocation3], 256
        $region88: #{tpu_custom_call.1} parent=83 // pred_fallthru
          _
        // Predicated region
        $region89: #{tpu_custom_call.1} parent=83 // pred_check
          %p538 = pneg %p198
        $region90: #{tpu_custom_call.1} parent=83 // pred_check_branch
          %540 = sbr.rel (%p538) target = $region92
        $region91: #{tpu_custom_call.1} parent=83 // pred_region
          %542 = dma.done [#allocation6], 256
        $region92: #{tpu_custom_call.1} parent=83 // pred_fallthru
          _
        // Predicated region
        $region93: #{tpu_custom_call.1} parent=83 // pred_check
          %p543 = pneg %p282
        $region94: #{tpu_custom_call.1} parent=83 // pred_check_branch
          %545 = sbr.rel (%p543) target = $region96
        $region95: #{tpu_custom_call.1} parent=83 // pred_region
          %547 = dma.done [#allocation6], 256
        $region96: #{tpu_custom_call.1} parent=83 // pred_fallthru
          _
        %p548 = scmp.lt.s32.totalorder %s36, 1
        %s549 = scalar_select %p548, %s36, 1
        %p550 = scmp.lt.s32.totalorder %s37, 0
        %s551 = scalar_select %p550, %s37, 0
        %s552 = sadd.s32 %s551, %s549
        %s553 = smul.addr %s552, 8
        %s554 = scalar_lea.vmem %s0, %s553
        %p555 = pneg %p67
        %p556 = pneg %p64
        %p557 = scmp.lt.s32.totalorder %s36, 1
        %s558 = scalar_select %p557, %s36, 1
        %s559 = smul.addr %s558, 8
        %s560 = scalar_lea.vmem %s1, %s559
        %p561 = pneg %p93
        %p562 = pneg %p90
        %p563 = pneg %p114
        %p564 = pneg %p111
        %p565 = pneg %p135
        %p566 = pneg %p132
        %p567 = pneg %p156
        %p568 = pneg %p153
        %p569 = pneg %p177
        %p570 = pneg %p174
        %p571 = pneg %p198
        %p572 = pneg %p195
        %p573 = pneg %p219
        %p574 = pneg %p216
        %p575 = pneg %p240
        %p576 = pneg %p237
        %p577 = pneg %p261
        %p578 = pneg %p258
        %p579 = pneg %p282
        %p580 = pneg %p279
        %p581 = pneg %p303
        %p582 = pneg %p300
        %p583 = pneg %p324
        %p584 = pneg %p321
        %p585 = pneg %p345
        %p586 = pneg %p342
        %p587 = pneg %p366
        %p588 = pneg %p363
        %p589 = pneg %p387
        %p590 = pneg %p384
        %p591 = pneg %p415
        %p592 = pneg %p412
        %s593 = sand.u32 %s402, 1
        %s594 = scalar_lea.sflag [#allocation4], %s593
        %s595 = sand.u32 %s402, 1
        %s596 = smul.addr %s595, 8
        %s597 = scalar_lea.vmem [#allocation8], %s596
        %p598 = scmp.lt.s32.totalorder %s36, 1
        %s599 = scalar_select %p598, %s36, 1
        %p600 = scmp.lt.s32.totalorder %s37, 0
        %s601 = scalar_select %p600, %s37, 0
        %s602 = sadd.s32 %s601, %s599
        %s603 = smul.addr %s602, 8
        %s604 = scalar_lea.vmem %s0, %s603
        %p605 = scmp.lt.s32.totalorder %s36, 1
        %s606 = scalar_select %p605, %s36, 1
        %s607 = smul.addr %s606, 8
        %s608 = scalar_lea.vmem %s1, %s607
        %v610 = vld [vmem:[%s604] sm:$0xff]
        %v611 = vld [vmem:[%s608] sm:$0xff]
        %v612 = vpack.c.bf16 %v610, %v610
        %v613 = vld [vmem:[%s2] sm:$0xf]
        %v614 = vld [vmem:[%s2 + $0x4] sm:$0xf]
        %v615 = vld [vmem:[%s2 + $0x8] sm:$0xf]
        %v616 = vld [vmem:[%s2 + $0xc] sm:$0xf]
        %v617 = vld [vmem:[%s3] sm:$0x1]
        %v619 = vperm.slane %v617, 0
        %v625 = vunpack.c.l.b16 %v613
        %v626 = vunpack.c.l.b16 %v614
        %v627 = vunpack.c.l.b16 %v615
        %v628 = vunpack.c.l.b16 %v616
        %v629 = vpack.c.b16 %v626, %v625
        %v630 = vpack.c.b16 %v628, %v627
        %vm633 = vcmask 261120
        %v635 = vsel %vm633, %v612, 0
        %637 = vmatpush.bf16.msra.mxu0 0
        %638 = vmatpush.bf16.msra.mxu0 0
        %639 = vmatpush.bf16.msra.mxu0 0
        %640 = vmatpush.bf16.msra.mxu0 0
        %641 = vmatpush.bf16.msra.mxu0 0
        %642 = vmatpush.bf16.msra.mxu0 0
        %643 = vmatpush.bf16.msra.mxu0 %v630
        %644 = vmatpush.bf16.msra.mxu0 %v629
        %645 = vmatmul.bf16.gmra.mxu0 %v635
        %v646 = vpop.f32.mrf.mxu0
        %v647 = vadd.f32 %v619, %v646
        %v648 = vpop.f32.mrf.mxu0
        %649 = vdwg.mxu0
        %v650 = vmul.f32 %v647, 0.35355338
        %v651 = vpack.c.bf16 %v611, %v611
        %v652 = vld [vmem:[#allocation2] sm:$0xf]
        %v653 = vld [vmem:[#allocation2 + $0x4] sm:$0xf]
        %v654 = vld [vmem:[#allocation2 + $0x8] sm:$0xf]
        %v655 = vld [vmem:[#allocation2 + $0xc] sm:$0xf]
        %v656 = vld [vmem:[%s5] sm:$0x1]
        %v658 = vperm.slane %v656, 0
        %v664 = vunpack.c.l.b16 %v652
        %v665 = vunpack.c.l.b16 %v653
        %v666 = vunpack.c.l.b16 %v654
        %v667 = vunpack.c.l.b16 %v655
        %v668 = vpack.c.b16 %v665, %v664
        %v669 = vpack.c.b16 %v667, %v666
        %v673 = vsel %vm633, %v651, 0
        %675 = vmatpush.bf16.msra.mxu0 0
        %676 = vmatpush.bf16.msra.mxu0 0
        %677 = vmatpush.bf16.msra.mxu0 0
        %678 = vmatpush.bf16.msra.mxu0 0
        %679 = vmatpush.bf16.msra.mxu0 0
        %680 = vmatpush.bf16.msra.mxu0 0
        %681 = vmatpush.bf16.msra.mxu0 %v669
        %682 = vmatpush.bf16.msra.mxu0 %v668
        %683 = vmatmul.bf16.gmra.mxu0 %v673
        %v684 = vpop.f32.mrf.mxu0
        %v685 = vadd.f32 %v658, %v684
        %v686 = vpop.f32.mrf.mxu0
        %687 = vdwg.mxu0
        %689 = vrot.lane.b32.xlu0 %v650, 120
        %v690 = vpop.permute.xlu0 %689
        %692 = vrot.lane.b32.xlu0 %v650, 112
        %v693 = vpop.permute.xlu0 %692
        %695 = vrot.lane.b32.xlu0 %v650, 104
        %v696 = vpop.permute.xlu0 %695
        %v698 = vrot.slane %v693, 4
        %vm699 = vcmask 1047556
        %v700 = vsel %vm699, %v698, %v650
        %v701 = vrot.slane %v650, 4
        %v702 = vsel %vm699, %v693, %v701
        %v704 = vunpack.c.l.s4 1983009808
        %v705 = vunpack.c.0.s8 %v704
        %v706 = vperm.slane %v700, %v705
        %v708 = vunpack.c.l.s4 1983009808
        %v709 = vunpack.c.0.s8 %v708
        %v710 = vperm.slane %v702, %v709
        %v711 = vrot.slane %v696, 4
        %v712 = vsel %vm699, %v711, %v690
        %v713 = vrot.slane %v690, 4
        %v714 = vsel %vm699, %v696, %v713
        %v716 = vunpack.c.l.s4 1983009808
        %v717 = vunpack.c.0.s8 %v716
        %v718 = vperm.slane %v712, %v717
        %v720 = vunpack.c.l.s4 1983009808
        %v721 = vunpack.c.0.s8 %v720
        %v722 = vperm.slane %v714, %v721
        %v723 = vrot.slane %v718, 4
        %v724 = vsel %vm699, %v723, %v706
        %v725 = vrot.slane %v706, 4
        %v726 = vsel %vm699, %v718, %v725
        %v728 = vunpack.c.l.s4 1934713408
        %v729 = vunpack.c.0.s8 %v728
        %v730 = vperm.slane %v724, %v729
        %v732 = vunpack.c.l.s4 1934713408
        %v733 = vunpack.c.0.s8 %v732
        %v734 = vperm.slane %v726, %v733
        %v735 = vrot.slane %v722, 4
        %v736 = vsel %vm699, %v735, %v710
        %v737 = vrot.slane %v710, 4
        %v738 = vsel %vm699, %v722, %v737
        %v740 = vunpack.c.l.s4 1934713408
        %v741 = vunpack.c.0.s8 %v740
        %v742 = vperm.slane %v736, %v741
        %v744 = vunpack.c.l.s4 1934713408
        %v745 = vunpack.c.0.s8 %v744
        %v746 = vperm.slane %v738, %v745
        %v747 = vrot.slane %v730, 4
        %v748 = vsel %vm699, 0.0, %v747
        %v749 = vrot.slane %v734, 4
        %v750 = vsel %vm699, 0.0, %v749
        %v751 = vrot.slane %v742, 4
        %v752 = vsel %vm699, 0.0, %v751
        %v753 = vrot.slane %v746, 4
        %v754 = vsel %vm699, 0.0, %v753
        %v755 = vsel %vm699, %v749, %v730
        %v757 = vunpack.c.l.s4 1983009808
        %v758 = vunpack.c.0.s8 %v757
        %v759 = vperm.slane %v755, %v758
        %v760 = vrot.slane %v750, 4
        %v761 = vsel %vm699, %v760, %v748
        %v763 = vunpack.c.l.s4 1983009808
        %v764 = vunpack.c.0.s8 %v763
        %v765 = vperm.slane %v761, %v764
        %v766 = vsel %vm699, %v753, %v742
        %v768 = vunpack.c.l.s4 1983009808
        %v769 = vunpack.c.0.s8 %v768
        %v770 = vperm.slane %v766, %v769
        %v771 = vrot.slane %v754, 4
        %v772 = vsel %vm699, %v771, %v752
        %v774 = vunpack.c.l.s4 1983009808
        %v775 = vunpack.c.0.s8 %v774
        %v776 = vperm.slane %v772, %v775
        %v777 = vrot.slane %v765, 4
        %v778 = vsel %vm699, %v777, %v759
        %v779 = vrot.slane %v759, 4
        %v780 = vsel %vm699, %v765, %v779
        %v782 = vunpack.c.l.s4 1934713408
        %v783 = vunpack.c.0.s8 %v782
        %v784 = vperm.slane %v778, %v783
        %v786 = vunpack.c.l.s4 1934713408
        %v787 = vunpack.c.0.s8 %v786
        %v788 = vperm.slane %v780, %v787
        %v789 = vrot.slane %v776, 4
        %v790 = vsel %vm699, %v789, %v770
        %v791 = vrot.slane %v770, 4
        %v792 = vsel %vm699, %v776, %v791
        %v794 = vunpack.c.l.s4 1934713408
        %v795 = vunpack.c.0.s8 %v794
        %v796 = vperm.slane %v790, %v795
        %v798 = vunpack.c.l.s4 1934713408
        %v799 = vunpack.c.0.s8 %v798
        %v800 = vperm.slane %v792, %v799
        %v801 = vrot.slane %v796, 4
        %v802 = vsel %vm699, %v801, %v784
        %v803 = vrot.slane %v784, 4
        %v804 = vsel %vm699, %v796, %v803
        %v805 = vrot.slane %v800, 4
        %v806 = vsel %vm699, %v805, %v788
        %v807 = vrot.slane %v788, 4
        %v808 = vsel %vm699, %v800, %v807
        %810 = vrot.lane.b32.xlu0 %v685, 120
        %v811 = vpop.permute.xlu0 %810
        %813 = vrot.lane.b32.xlu0 %v685, 112
        %v814 = vpop.permute.xlu0 %813
        %816 = vrot.lane.b32.xlu0 %v685, 104
        %v817 = vpop.permute.xlu0 %816
        %v819 = vrot.slane %v814, 4
        %v820 = vsel %vm699, %v819, %v685
        %v821 = vrot.slane %v685, 4
        %v822 = vsel %vm699, %v814, %v821
        %v824 = vunpack.c.l.s4 1983009808
        %v825 = vunpack.c.0.s8 %v824
        %v826 = vperm.slane %v820, %v825
        %v828 = vunpack.c.l.s4 1983009808
        %v829 = vunpack.c.0.s8 %v828
        %v830 = vperm.slane %v822, %v829
        %v831 = vrot.slane %v817, 4
        %v832 = vsel %vm699, %v831, %v811
        %v833 = vrot.slane %v811, 4
        %v834 = vsel %vm699, %v817, %v833
        %v836 = vunpack.c.l.s4 1983009808
        %v837 = vunpack.c.0.s8 %v836
        %v838 = vperm.slane %v832, %v837
        %v840 = vunpack.c.l.s4 1983009808
        %v841 = vunpack.c.0.s8 %v840
        %v842 = vperm.slane %v834, %v841
        %v843 = vrot.slane %v838, 4
        %v844 = vsel %vm699, %v843, %v826
        %v845 = vrot.slane %v826, 4
        %v846 = vsel %vm699, %v838, %v845
        %v848 = vunpack.c.l.s4 1934713408
        %v849 = vunpack.c.0.s8 %v848
        %v850 = vperm.slane %v844, %v849
        %v852 = vunpack.c.l.s4 1934713408
        %v853 = vunpack.c.0.s8 %v852
        %v854 = vperm.slane %v846, %v853
        %v855 = vrot.slane %v842, 4
        %v856 = vsel %vm699, %v855, %v830
        %v857 = vrot.slane %v830, 4
        %v858 = vsel %vm699, %v842, %v857
        %v860 = vunpack.c.l.s4 1934713408
        %v861 = vunpack.c.0.s8 %v860
        %v862 = vperm.slane %v856, %v861
        %v864 = vunpack.c.l.s4 1934713408
        %v865 = vunpack.c.0.s8 %v864
        %v866 = vperm.slane %v858, %v865
        %v867 = vrot.slane %v850, 4
        %v868 = vsel %vm699, 0.0, %v867
        %v869 = vrot.slane %v854, 4
        %v870 = vsel %vm699, 0.0, %v869
        %v871 = vrot.slane %v862, 4
        %v872 = vsel %vm699, 0.0, %v871
        %v873 = vrot.slane %v866, 4
        %v874 = vsel %vm699, 0.0, %v873
        %v875 = vsel %vm699, %v869, %v850
        %v877 = vunpack.c.l.s4 1983009808
        %v878 = vunpack.c.0.s8 %v877
        %v879 = vperm.slane %v875, %v878
        %v880 = vrot.slane %v870, 4
        %v881 = vsel %vm699, %v880, %v868
        %v883 = vunpack.c.l.s4 1983009808
        %v884 = vunpack.c.0.s8 %v883
        %v885 = vperm.slane %v881, %v884
        %v886 = vsel %vm699, %v873, %v862
        %v888 = vunpack.c.l.s4 1983009808
        %v889 = vunpack.c.0.s8 %v888
        %v890 = vperm.slane %v886, %v889
        %v891 = vrot.slane %v874, 4
        %v892 = vsel %vm699, %v891, %v872
        %v894 = vunpack.c.l.s4 1983009808
        %v895 = vunpack.c.0.s8 %v894
        %v896 = vperm.slane %v892, %v895
        %v897 = vrot.slane %v885, 4
        %v898 = vsel %vm699, %v897, %v879
        %v899 = vrot.slane %v879, 4
        %v900 = vsel %vm699, %v885, %v899
        %v902 = vunpack.c.l.s4 1934713408
        %v903 = vunpack.c.0.s8 %v902
        %v904 = vperm.slane %v898, %v903
        %v906 = vunpack.c.l.s4 1934713408
        %v907 = vunpack.c.0.s8 %v906
        %v908 = vperm.slane %v900, %v907
        %v909 = vrot.slane %v896, 4
        %v910 = vsel %vm699, %v909, %v890
        %v911 = vrot.slane %v890, 4
        %v912 = vsel %vm699, %v896, %v911
        %v914 = vunpack.c.l.s4 1934713408
        %v915 = vunpack.c.0.s8 %v914
        %v916 = vperm.slane %v910, %v915
        %v918 = vunpack.c.l.s4 1934713408
        %v919 = vunpack.c.0.s8 %v918
        %v920 = vperm.slane %v912, %v919
        %v921 = vrot.slane %v916, 4
        %v922 = vsel %vm699, %v921, %v904
        %v923 = vrot.slane %v904, 4
        %v924 = vsel %vm699, %v916, %v923
        %v925 = vrot.slane %v920, 4
        %v926 = vsel %vm699, %v925, %v908
        %v927 = vrot.slane %v908, 4
        %v928 = vsel %vm699, %v920, %v927
        %929 = vrot.lane.b32.xlu0 %v685, 96
        %v930 = vpop.permute.xlu0 %929
        %931 = vrot.lane.b32.xlu0 %v811, 96
        %v932 = vpop.permute.xlu0 %931
        %933 = vrot.lane.b32.xlu0 %v814, 96
        %v934 = vpop.permute.xlu0 %933
        %935 = vrot.lane.b32.xlu0 %v817, 96
        %v936 = vpop.permute.xlu0 %935
        %v941 = vrot.slane %v934, 4
        %v942 = vsel %vm699, %v941, %v930
        %v943 = vrot.slane %v930, 4
        %v944 = vsel %vm699, %v934, %v943
        %v946 = vunpack.c.l.s4 1983009808
        %v947 = vunpack.c.0.s8 %v946
        %v948 = vperm.slane %v942, %v947
        %v950 = vunpack.c.l.s4 1983009808
        %v951 = vunpack.c.0.s8 %v950
        %v952 = vperm.slane %v944, %v951
        %v953 = vrot.slane %v936, 4
        %v954 = vsel %vm699, %v953, %v932
        %v955 = vrot.slane %v932, 4
        %v956 = vsel %vm699, %v936, %v955
        %v958 = vunpack.c.l.s4 1983009808
        %v959 = vunpack.c.0.s8 %v958
        %v960 = vperm.slane %v954, %v959
        %v962 = vunpack.c.l.s4 1983009808
        %v963 = vunpack.c.0.s8 %v962
        %v964 = vperm.slane %v956, %v963
        %v965 = vrot.slane %v960, 4
        %v966 = vsel %vm699, %v965, %v948
        %v967 = vrot.slane %v948, 4
        %v968 = vsel %vm699, %v960, %v967
        %v970 = vunpack.c.l.s4 1934713408
        %v971 = vunpack.c.0.s8 %v970
        %v972 = vperm.slane %v966, %v971
        %v974 = vunpack.c.l.s4 1934713408
        %v975 = vunpack.c.0.s8 %v974
        %v976 = vperm.slane %v968, %v975
        %v977 = vrot.slane %v964, 4
        %v978 = vsel %vm699, %v977, %v952
        %v979 = vrot.slane %v952, 4
        %v980 = vsel %vm699, %v964, %v979
        %v982 = vunpack.c.l.s4 1934713408
        %v983 = vunpack.c.0.s8 %v982
        %v984 = vperm.slane %v978, %v983
        %v986 = vunpack.c.l.s4 1934713408
        %v987 = vunpack.c.0.s8 %v986
        %v988 = vperm.slane %v980, %v987
        %v989 = vrot.slane %v972, 4
        %v990 = vsel %vm699, 0.0, %v989
        %v991 = vrot.slane %v976, 4
        %v992 = vsel %vm699, 0.0, %v991
        %v993 = vrot.slane %v984, 4
        %v994 = vsel %vm699, 0.0, %v993
        %v995 = vrot.slane %v988, 4
        %v996 = vsel %vm699, 0.0, %v995
        %v997 = vsel %vm699, %v991, %v972
        %v999 = vunpack.c.l.s4 1983009808
        %v1000 = vunpack.c.0.s8 %v999
        %v1001 = vperm.slane %v997, %v1000
        %v1002 = vrot.slane %v992, 4
        %v1003 = vsel %vm699, %v1002, %v990
        %v1005 = vunpack.c.l.s4 1983009808
        %v1006 = vunpack.c.0.s8 %v1005
        %v1007 = vperm.slane %v1003, %v1006
        %v1008 = vsel %vm699, %v995, %v984
        %v1010 = vunpack.c.l.s4 1983009808
        %v1011 = vunpack.c.0.s8 %v1010
        %v1012 = vperm.slane %v1008, %v1011
        %v1013 = vrot.slane %v996, 4
        %v1014 = vsel %vm699, %v1013, %v994
        %v1016 = vunpack.c.l.s4 1983009808
        %v1017 = vunpack.c.0.s8 %v1016
        %v1018 = vperm.slane %v1014, %v1017
        %v1019 = vrot.slane %v1007, 4
        %v1020 = vsel %vm699, %v1019, %v1001
        %v1021 = vrot.slane %v1001, 4
        %v1022 = vsel %vm699, %v1007, %v1021
        %v1024 = vunpack.c.l.s4 1934713408
        %v1025 = vunpack.c.0.s8 %v1024
        %v1026 = vperm.slane %v1020, %v1025
        %v1028 = vunpack.c.l.s4 1934713408
        %v1029 = vunpack.c.0.s8 %v1028
        %v1030 = vperm.slane %v1022, %v1029
        %v1031 = vrot.slane %v1018, 4
        %v1032 = vsel %vm699, %v1031, %v1012
        %v1033 = vrot.slane %v1012, 4
        %v1034 = vsel %vm699, %v1018, %v1033
        %v1036 = vunpack.c.l.s4 1934713408
        %v1037 = vunpack.c.0.s8 %v1036
        %v1038 = vperm.slane %v1032, %v1037
        %v1040 = vunpack.c.l.s4 1934713408
        %v1041 = vunpack.c.0.s8 %v1040
        %v1042 = vperm.slane %v1034, %v1041
        %v1043 = vrot.slane %v1038, 4
        %v1044 = vsel %vm699, %v1043, %v1026
        %v1045 = vrot.slane %v1026, 4
        %v1046 = vsel %vm699, %v1038, %v1045
        %v1047 = vrot.slane %v1042, 4
        %v1048 = vsel %vm699, %v1047, %v1030
        %v1049 = vrot.slane %v1030, 4
        %v1050 = vsel %vm699, %v1042, %v1049
        %v1051 = vpack.c.bf16 %v802, %v802
        %v1052 = vpack.c.bf16 %v804, %v804
        %v1053 = vpack.c.bf16 %v806, %v806
        %v1054 = vpack.c.bf16 %v808, %v808
        %v1055 = vpack.c.bf16 %v922, %v922
        %v1056 = vpack.c.bf16 %v924, %v924
        %v1057 = vpack.c.bf16 %v926, %v926
        %v1058 = vpack.c.bf16 %v928, %v928
        %vm1059 = vcmask 64512
        %v1061 = vsel %vm1059, %v1051, 0
        %v1064 = vsel %vm1059, %v1055, 0
        %1066 = vmatpush.bf16.xpose.msra.mxu0 0
        %1067 = vmatpush.bf16.xpose.msra.mxu0 0
        %1068 = vmatpush.bf16.xpose.msra.mxu0 0
        %1069 = vmatpush.bf16.xpose.msra.mxu0 0
        %1070 = vmatpush.bf16.xpose.msra.mxu0 0
        %1071 = vmatpush.bf16.xpose.msra.mxu0 0
        %1072 = vmatpush.bf16.xpose.msra.mxu0 0
        %1073 = vmatpush.bf16.xpose.msra.mxu0 %v1064
        %1074 = vmatmul.bf16.gmra.mxu0 %v1061
        %v1075 = vpop.f32.mrf.mxu0
        %v1076 = vadd.f32 0.0, %v1075
        %v1077 = vpop.f32.mrf.mxu0
        %1078 = vdwg.mxu0
        %v1080 = vsel %vm1059, %v1052, 0
        %v1083 = vsel %vm1059, %v1056, 0
        %1085 = vmatpush.bf16.xpose.msra.mxu0 0
        %1086 = vmatpush.bf16.xpose.msra.mxu0 0
        %1087 = vmatpush.bf16.xpose.msra.mxu0 0
        %1088 = vmatpush.bf16.xpose.msra.mxu0 0
        %1089 = vmatpush.bf16.xpose.msra.mxu0 0
        %1090 = vmatpush.bf16.xpose.msra.mxu0 0
        %1091 = vmatpush.bf16.xpose.msra.mxu0 0
        %1092 = vmatpush.bf16.xpose.msra.mxu0 %v1083
        %1093 = vmatmul.bf16.gmra.mxu0 %v1080
        %v1094 = vpop.f32.mrf.mxu0
        %v1095 = vadd.f32 0.0, %v1094
        %v1096 = vpop.f32.mrf.mxu0
        %1097 = vdwg.mxu0
        %v1099 = vsel %vm1059, %v1053, 0
        %v1102 = vsel %vm1059, %v1057, 0
        %1104 = vmatpush.bf16.xpose.msra.mxu0 0
        %1105 = vmatpush.bf16.xpose.msra.mxu0 0
        %1106 = vmatpush.bf16.xpose.msra.mxu0 0
        %1107 = vmatpush.bf16.xpose.msra.mxu0 0
        %1108 = vmatpush.bf16.xpose.msra.mxu0 0
        %1109 = vmatpush.bf16.xpose.msra.mxu0 0
        %1110 = vmatpush.bf16.xpose.msra.mxu0 0
        %1111 = vmatpush.bf16.xpose.msra.mxu0 %v1102
        %1112 = vmatmul.bf16.gmra.mxu0 %v1099
        %v1113 = vpop.f32.mrf.mxu0
        %v1114 = vadd.f32 0.0, %v1113
        %v1115 = vpop.f32.mrf.mxu0
        %1116 = vdwg.mxu0
        %v1118 = vsel %vm1059, %v1054, 0
        %v1121 = vsel %vm1059, %v1058, 0
        %1123 = vmatpush.bf16.xpose.msra.mxu0 0
        %1124 = vmatpush.bf16.xpose.msra.mxu0 0
        %1125 = vmatpush.bf16.xpose.msra.mxu0 0
        %1126 = vmatpush.bf16.xpose.msra.mxu0 0
        %1127 = vmatpush.bf16.xpose.msra.mxu0 0
        %1128 = vmatpush.bf16.xpose.msra.mxu0 0
        %1129 = vmatpush.bf16.xpose.msra.mxu0 0
        %1130 = vmatpush.bf16.xpose.msra.mxu0 %v1121
        %1131 = vmatmul.bf16.gmra.mxu0 %v1118
        %v1132 = vpop.f32.mrf.mxu0
        %v1133 = vadd.f32 0.0, %v1132
        %v1134 = vpop.f32.mrf.mxu0
        %1135 = vdwg.mxu0
        %v1136 = vsel %vm1059, %v1076, -inf
        %1137 = vmax.xlane.f32.xlu0 %v1136
        %v1138 = vpop.xlane.xlu0 %1137
        %v1139 = vsel %vm1059, %v1095, -inf
        %1140 = vmax.xlane.f32.xlu0 %v1139
        %v1141 = vpop.xlane.xlu0 %1140
        %v1142 = vsel %vm1059, %v1114, -inf
        %1143 = vmax.xlane.f32.xlu0 %v1142
        %v1144 = vpop.xlane.xlu0 %1143
        %v1145 = vsel %vm1059, %v1133, -inf
        %1146 = vmax.xlane.f32.xlu0 %v1145
        %v1147 = vpop.xlane.xlu0 %1146
        %v1148 = vsub.f32 %v1076, %v1138
        %v1149 = vsub.f32 %v1095, %v1141
        %v1150 = vsub.f32 %v1114, %v1144
        %v1151 = vsub.f32 %v1133, %v1147
        %v1152 = vmul.f32 %v1148, 1.442695
        %v1153 = vpow.pop %v1152
        %v1154 = vmul.f32 %v1149, 1.442695
        %v1155 = vpow.pop %v1154
        %v1156 = vmul.f32 %v1150, 1.442695
        %v1157 = vpow.pop %v1156
        %v1158 = vmul.f32 %v1151, 1.442695
        %v1159 = vpow.pop %v1158
        %v1160 = vsel %vm1059, %v1153, 0.0
        %1161 = vadd.xlane.f32.xlu0 %v1160
        %v1162 = vpop.xlane.xlu0 %1161
        %v1163 = vsel %vm1059, %v1155, 0.0
        %1164 = vadd.xlane.f32.xlu0 %v1163
        %v1165 = vpop.xlane.xlu0 %1164
        %v1166 = vsel %vm1059, %v1157, 0.0
        %1167 = vadd.xlane.f32.xlu0 %v1166
        %v1168 = vpop.xlane.xlu0 %1167
        %v1169 = vsel %vm1059, %v1159, 0.0
        %1170 = vadd.xlane.f32.xlu0 %v1169
        %v1171 = vpop.xlane.xlu0 %1170
        %v1172 = vrcp.pop %v1162
        %v1173 = vrcp.pop %v1165
        %v1174 = vrcp.pop %v1168
        %v1175 = vrcp.pop %v1171
        %v1176 = vmul.f32 %v1153, %v1172
        %v1177 = vmul.f32 %v1155, %v1173
        %v1178 = vmul.f32 %v1157, %v1174
        %v1179 = vmul.f32 %v1159, %v1175
        %v1180 = vpack.c.bf16 %v1176, %v1176
        %v1181 = vpack.c.bf16 %v1177, %v1177
        %v1182 = vpack.c.bf16 %v1178, %v1178
        %v1183 = vpack.c.bf16 %v1179, %v1179
        %v1184 = vpack.c.bf16 %v1044, %v1044
        %v1185 = vpack.c.bf16 %v1046, %v1046
        %v1186 = vpack.c.bf16 %v1048, %v1048
        %v1187 = vpack.c.bf16 %v1050, %v1050
        %v1189 = vsel %vm1059, %v1180, 0
        %vm1191 = vcmask 1043456
        %v1193 = vsel %vm1191, %v1184, 0
        %1195 = vmatpush.bf16.msra.mxu0 0
        %1196 = vmatpush.bf16.msra.mxu0 0
        %1197 = vmatpush.bf16.msra.mxu0 0
        %1198 = vmatpush.bf16.msra.mxu0 0
        %1199 = vmatpush.bf16.msra.mxu0 0
        %1200 = vmatpush.bf16.msra.mxu0 0
        %1201 = vmatpush.bf16.msra.mxu0 0
        %1202 = vmatpush.bf16.msra.mxu0 %v1193
        %1203 = vmatmul.bf16.gmra.mxu0 %v1189
        %v1204 = vpop.f32.mrf.mxu0
        %v1205 = vadd.f32 0.0, %v1204
        %v1206 = vpop.f32.mrf.mxu0
        %1207 = vdwg.mxu0
        %v1209 = vsel %vm1059, %v1181, 0
        %v1212 = vsel %vm1191, %v1185, 0
        %1214 = vmatpush.bf16.msra.mxu0 0
        %1215 = vmatpush.bf16.msra.mxu0 0
        %1216 = vmatpush.bf16.msra.mxu0 0
        %1217 = vmatpush.bf16.msra.mxu0 0
        %1218 = vmatpush.bf16.msra.mxu0 0
        %1219 = vmatpush.bf16.msra.mxu0 0
        %1220 = vmatpush.bf16.msra.mxu0 0
        %1221 = vmatpush.bf16.msra.mxu0 %v1212
        %1222 = vmatmul.bf16.gmra.mxu0 %v1209
        %v1223 = vpop.f32.mrf.mxu0
        %v1224 = vadd.f32 0.0, %v1223
        %v1225 = vpop.f32.mrf.mxu0
        %1226 = vdwg.mxu0
        %v1228 = vsel %vm1059, %v1182, 0
        %v1231 = vsel %vm1191, %v1186, 0
        %1233 = vmatpush.bf16.msra.mxu0 0
        %1234 = vmatpush.bf16.msra.mxu0 0
        %1235 = vmatpush.bf16.msra.mxu0 0
        %1236 = vmatpush.bf16.msra.mxu0 0
        %1237 = vmatpush.bf16.msra.mxu0 0
        %1238 = vmatpush.bf16.msra.mxu0 0
        %1239 = vmatpush.bf16.msra.mxu0 0
        %1240 = vmatpush.bf16.msra.mxu0 %v1231
        %1241 = vmatmul.bf16.gmra.mxu0 %v1228
        %v1242 = vpop.f32.mrf.mxu0
        %v1243 = vadd.f32 0.0, %v1242
        %v1244 = vpop.f32.mrf.mxu0
        %1245 = vdwg.mxu0
        %v1247 = vsel %vm1059, %v1183, 0
        %v1250 = vsel %vm1191, %v1187, 0
        %1252 = vmatpush.bf16.msra.mxu0 0
        %1253 = vmatpush.bf16.msra.mxu0 0
        %1254 = vmatpush.bf16.msra.mxu0 0
        %1255 = vmatpush.bf16.msra.mxu0 0
        %1256 = vmatpush.bf16.msra.mxu0 0
        %1257 = vmatpush.bf16.msra.mxu0 0
        %1258 = vmatpush.bf16.msra.mxu0 0
        %1259 = vmatpush.bf16.msra.mxu0 %v1250
        %1260 = vmatmul.bf16.gmra.mxu0 %v1247
        %v1261 = vpop.f32.mrf.mxu0
        %v1262 = vadd.f32 0.0, %v1261
        %v1263 = vpop.f32.mrf.mxu0
        %1264 = vdwg.mxu0
        %v1265 = vrot.slane %v1243, 4
        %v1266 = vsel %vm699, %v1265, %v1205
        %v1267 = vrot.slane %v1205, 4
        %v1268 = vsel %vm699, %v1243, %v1267
        %v1270 = vunpack.c.l.s4 1983009808
        %v1271 = vunpack.c.0.s8 %v1270
        %v1272 = vperm.slane %v1266, %v1271
        %v1274 = vunpack.c.l.s4 1983009808
        %v1275 = vunpack.c.0.s8 %v1274
        %v1276 = vperm.slane %v1268, %v1275
        %v1277 = vrot.slane %v1262, 4
        %v1278 = vsel %vm699, %v1277, %v1224
        %v1279 = vrot.slane %v1224, 4
        %v1280 = vsel %vm699, %v1262, %v1279
        %v1282 = vunpack.c.l.s4 1983009808
        %v1283 = vunpack.c.0.s8 %v1282
        %v1284 = vperm.slane %v1278, %v1283
        %v1286 = vunpack.c.l.s4 1983009808
        %v1287 = vunpack.c.0.s8 %v1286
        %v1288 = vperm.slane %v1280, %v1287
        %v1289 = vrot.slane %v1284, 4
        %v1290 = vsel %vm699, %v1289, %v1272
        %v1291 = vrot.slane %v1272, 4
        %v1292 = vsel %vm699, %v1284, %v1291
        %v1294 = vunpack.c.l.s4 1934713408
        %v1295 = vunpack.c.0.s8 %v1294
        %v1296 = vperm.slane %v1290, %v1295
        %v1298 = vunpack.c.l.s4 1934713408
        %v1299 = vunpack.c.0.s8 %v1298
        %v1300 = vperm.slane %v1292, %v1299
        %v1301 = vrot.slane %v1288, 4
        %v1302 = vsel %vm699, %v1301, %v1276
        %v1303 = vrot.slane %v1276, 4
        %v1304 = vsel %vm699, %v1288, %v1303
        %v1306 = vunpack.c.l.s4 1934713408
        %v1307 = vunpack.c.0.s8 %v1306
        %v1308 = vperm.slane %v1302, %v1307
        %v1310 = vunpack.c.l.s4 1934713408
        %v1311 = vunpack.c.0.s8 %v1310
        %v1312 = vperm.slane %v1304, %v1311
        %v1313 = vrot.slane %v1296, 4
        %v1314 = vsel %vm699, 0.0, %v1313
        %v1315 = vrot.slane %v1300, 4
        %v1316 = vsel %vm699, 0.0, %v1315
        %v1317 = vrot.slane %v1308, 4
        %v1318 = vsel %vm699, 0.0, %v1317
        %v1319 = vrot.slane %v1312, 4
        %v1320 = vsel %vm699, 0.0, %v1319
        %v1321 = vsel %vm699, %v1315, %v1296
        %v1323 = vunpack.c.l.s4 1983009808
        %v1324 = vunpack.c.0.s8 %v1323
        %v1325 = vperm.slane %v1321, %v1324
        %v1326 = vrot.slane %v1316, 4
        %v1327 = vsel %vm699, %v1326, %v1314
        %v1329 = vunpack.c.l.s4 1983009808
        %v1330 = vunpack.c.0.s8 %v1329
        %v1331 = vperm.slane %v1327, %v1330
        %v1332 = vsel %vm699, %v1319, %v1308
        %v1334 = vunpack.c.l.s4 1983009808
        %v1335 = vunpack.c.0.s8 %v1334
        %v1336 = vperm.slane %v1332, %v1335
        %v1337 = vrot.slane %v1320, 4
        %v1338 = vsel %vm699, %v1337, %v1318
        %v1340 = vunpack.c.l.s4 1983009808
        %v1341 = vunpack.c.0.s8 %v1340
        %v1342 = vperm.slane %v1338, %v1341
        %v1343 = vrot.slane %v1331, 4
        %v1344 = vsel %vm699, %v1343, %v1325
        %v1345 = vrot.slane %v1325, 4
        %v1346 = vsel %vm699, %v1331, %v1345
        %v1348 = vunpack.c.l.s4 1934713408
        %v1349 = vunpack.c.0.s8 %v1348
        %v1350 = vperm.slane %v1344, %v1349
        %v1352 = vunpack.c.l.s4 1934713408
        %v1353 = vunpack.c.0.s8 %v1352
        %v1354 = vperm.slane %v1346, %v1353
        %v1355 = vrot.slane %v1342, 4
        %v1356 = vsel %vm699, %v1355, %v1336
        %v1357 = vrot.slane %v1336, 4
        %v1358 = vsel %vm699, %v1342, %v1357
        %v1360 = vunpack.c.l.s4 1934713408
        %v1361 = vunpack.c.0.s8 %v1360
        %v1362 = vperm.slane %v1356, %v1361
        %v1364 = vunpack.c.l.s4 1934713408
        %v1365 = vunpack.c.0.s8 %v1364
        %v1366 = vperm.slane %v1358, %v1365
        %v1367 = vrot.slane %v1362, 4
        %v1368 = vsel %vm699, %v1367, %v1350
        %v1369 = vrot.slane %v1350, 4
        %v1370 = vsel %vm699, %v1362, %v1369
        %v1371 = vrot.slane %v1366, 4
        %v1372 = vsel %vm699, %v1371, %v1354
        %v1373 = vrot.slane %v1354, 4
        %v1374 = vsel %vm699, %v1366, %v1373
        %1376 = vrot.lane.b32.xlu0 %v1370, 8
        %v1377 = vpop.permute.xlu0 %1376
        %1380 = vrot.lane.b32.xlu0 %v1372, 16
        %v1381 = vpop.permute.xlu0 %1380
        %1384 = vrot.lane.b32.xlu0 %v1374, 24
        %v1385 = vpop.permute.xlu0 %1384
        %v1387 = vsel %vm1059, %v1368, %v1377
        %vm1388 = vcmask 130048
        %v1389 = vsel %vm1388, %v1387, %v1381
        %vm1390 = vcmask 195584
        %v1391 = vsel %vm1390, %v1389, %v1385
        %v1392 = vpack.c.bf16 %v1391, %v1391
        %v1393 = vld [vmem:[#allocation5] sm:$0xf]
        %v1394 = vld [vmem:[#allocation5 + $0x4] sm:$0xf]
        %v1395 = vld [vmem:[#allocation5 + $0x8] sm:$0xf]
        %v1396 = vld [vmem:[#allocation5 + $0xc] sm:$0xf]
        %v1397 = vld [vmem:[%s7] sm:$0x1]
        %v1399 = vperm.slane %v1397, 0
        %v1405 = vunpack.c.l.b16 %v1393
        %v1406 = vunpack.c.l.b16 %v1394
        %v1407 = vunpack.c.l.b16 %v1395
        %v1408 = vunpack.c.l.b16 %v1396
        %v1409 = vpack.c.b16 %v1406, %v1405
        %v1410 = vpack.c.b16 %v1408, %v1407
        %v1414 = vsel %vm633, %v1392, 0
        %1416 = vmatpush.bf16.msra.mxu0 0
        %1417 = vmatpush.bf16.msra.mxu0 0
        %1418 = vmatpush.bf16.msra.mxu0 0
        %1419 = vmatpush.bf16.msra.mxu0 0
        %1420 = vmatpush.bf16.msra.mxu0 0
        %1421 = vmatpush.bf16.msra.mxu0 0
        %1422 = vmatpush.bf16.msra.mxu0 %v1410
        %1423 = vmatpush.bf16.msra.mxu0 %v1409
        %1424 = vmatmul.bf16.gmra.mxu0 %v1414
        %v1425 = vpop.f32.mrf.mxu0
        %v1426 = vadd.f32 %v1399, %v1425
        %v1427 = vpop.f32.mrf.mxu0
        %1428 = vdwg.mxu0
        %v1429 = vadd.f32 %v610, %v1426
        %v1430 = vsel %vm633, %v1429, 0.0
        %1431 = vadd.xlane.f32.xlu0 %v1430
        %v1432 = vpop.xlane.xlu0 %1431
        %v1433 = vrcp.pop 32.0
        %v1434 = vmul.f32 32.0, %v1433
        %v1435 = vsub.f32 1.0, %v1434
        %v1436 = vmul.f32 %v1433, %v1435
        %v1437 = vadd.f32 %v1433, %v1436
        %vm1438 = vweird.f32 %v1433
        %v1439 = vsel %vm1438, %v1433, %v1437
        %v1440 = vmul.f32 %v1432, %v1439
        %v1441 = vsub.f32 %v1429, %v1440
        %v1442 = vmul.f32 %v1441, %v1441
        %v1443 = vsel %vm633, %v1442, 0.0
        %1444 = vadd.xlane.f32.xlu0 %v1443
        %v1445 = vpop.xlane.xlu0 %1444
        %v1446 = vmul.f32 %v1445, %v1439
        %v1447 = vadd.f32 %v1446, 1e-05
        %v1448 = vrsqrt.pop %v1447
        %v1449 = vmul.f32 %v1448, %v1447
        %v1450 = vmul.f32 %v1449, %v1448
        %v1451 = vmul.f32 0.5, %v1450
        %v1452 = vsub.f32 1.5, %v1451
        %v1453 = vmul.f32 %v1448, %v1452
        %vm1454 = vweird.f32 %v1447
        %vm1455 = vweird.f32 %v1448
        %vm1456 = vmor %vm1454, %vm1455
        %v1457 = vsel %vm1456, %v1448, %v1453
        %v1458 = vmul.f32 %v1441, %v1457
        %v1459 = vld [vmem:[%s8] sm:$0x1]
        %v1461 = vperm.slane %v1459, 0
        %v1463 = vmul.f32 %v1458, %v1461
        %v1464 = vld [vmem:[%s9] sm:$0x1]
        %v1466 = vperm.slane %v1464, 0
        %v1468 = vadd.f32 %v1463, %v1466
        %v1469 = vpack.c.bf16 %v1468, %v1468
        %v1470 = vld [vmem:[#allocation7] sm:$0xf]
        %v1471 = vld [vmem:[#allocation7 + $0x4] sm:$0xf]
        %v1472 = vld [vmem:[#allocation7 + $0x8] sm:$0xf]
        %v1473 = vld [vmem:[#allocation7 + $0xc] sm:$0xf]
        %v1474 = vld [vmem:[%s11] sm:$0x1]
        %v1476 = vperm.slane %v1474, 0
        %v1482 = vunpack.c.l.b16 %v1470
        %v1483 = vunpack.c.l.b16 %v1471
        %v1484 = vunpack.c.l.b16 %v1472
        %v1485 = vunpack.c.l.b16 %v1473
        %v1486 = vpack.c.b16 %v1483, %v1482
        %v1487 = vpack.c.b16 %v1485, %v1484
        %v1491 = vsel %vm633, %v1469, 0
        %1493 = vmatpush.bf16.msra.mxu0 0
        %1494 = vmatpush.bf16.msra.mxu0 0
        %1495 = vmatpush.bf16.msra.mxu0 0
        %1496 = vmatpush.bf16.msra.mxu0 0
        %1497 = vmatpush.bf16.msra.mxu0 0
        %1498 = vmatpush.bf16.msra.mxu0 0
        %1499 = vmatpush.bf16.msra.mxu0 %v1487
        %1500 = vmatpush.bf16.msra.mxu0 %v1486
        %1501 = vmatmul.bf16.gmra.mxu0 %v1491
        %v1502 = vpop.f32.mrf.mxu0
        %v1503 = vadd.f32 %v1476, %v1502
        %v1504 = vpop.f32.mrf.mxu0
        %1505 = vdwg.mxu0
        %v1506 = vmax.f32 %v1503, 0.0
        %v1507 = vpack.c.bf16 %v1506, %v1506
        %v1508 = vld [vmem:[%s12] sm:$0xf]
        %v1509 = vld [vmem:[%s12 + $0x4] sm:$0xf]
        %v1510 = vld [vmem:[%s12 + $0x8] sm:$0xf]
        %v1511 = vld [vmem:[%s12 + $0xc] sm:$0xf]
        %v1512 = vld [vmem:[%s12 + $0x10] sm:$0xf]
        %v1513 = vld [vmem:[%s12 + $0x14] sm:$0xf]
        %v1514 = vld [vmem:[%s12 + $0x18] sm:$0xf]
        %v1515 = vld [vmem:[%s12 + $0x1c] sm:$0xf]
        %v1516 = vld [vmem:[%s13] sm:$0x1]
        %v1518 = vperm.slane %v1516, 0
        %v1528 = vunpack.c.l.b16 %v1508
        %v1529 = vunpack.c.l.b16 %v1509
        %v1530 = vunpack.c.l.b16 %v1510
        %v1531 = vunpack.c.l.b16 %v1511
        %v1532 = vunpack.c.l.b16 %v1512
        %v1533 = vunpack.c.l.b16 %v1513
        %v1534 = vunpack.c.l.b16 %v1514
        %v1535 = vunpack.c.l.b16 %v1515
        %v1536 = vpack.c.b16 %v1529, %v1528
        %v1537 = vpack.c.b16 %v1531, %v1530
        %v1538 = vpack.c.b16 %v1533, %v1532
        %v1539 = vpack.c.b16 %v1535, %v1534
        %vm1544 = vcmask 523264
        %v1546 = vsel %vm1544, %v1507, 0
        %1548 = vmatpush.bf16.msra.mxu0 0
        %1549 = vmatpush.bf16.msra.mxu0 0
        %1550 = vmatpush.bf16.msra.mxu0 0
        %1551 = vmatpush.bf16.msra.mxu0 0
        %1552 = vmatpush.bf16.msra.mxu0 %v1539
        %1553 = vmatpush.bf16.msra.mxu0 %v1538
        %1554 = vmatpush.bf16.msra.mxu0 %v1537
        %1555 = vmatpush.bf16.msra.mxu0 %v1536
        %1556 = vmatmul.bf16.gmra.mxu0 %v1546
        %v1557 = vpop.f32.mrf.mxu0
        %v1558 = vadd.f32 %v1518, %v1557
        %v1559 = vpop.f32.mrf.mxu0
        %1560 = vdwg.mxu0
        %v1561 = vadd.f32 %v1468, %v1558
        %v1562 = vsel %vm633, %v1561, 0.0
        %1563 = vadd.xlane.f32.xlu0 %v1562
        %v1564 = vpop.xlane.xlu0 %1563
        %v1565 = vmul.f32 %v1564, %v1439
        %v1566 = vsub.f32 %v1561, %v1565
        %v1567 = vmul.f32 %v1566, %v1566
        %v1568 = vsel %vm633, %v1567, 0.0
        %1569 = vadd.xlane.f32.xlu0 %v1568
        %v1570 = vpop.xlane.xlu0 %1569
        %v1571 = vmul.f32 %v1570, %v1439
        %v1572 = vadd.f32 %v1571, 1e-05
        %v1573 = vrsqrt.pop %v1572
        %v1574 = vmul.f32 %v1573, %v1572
        %v1575 = vmul.f32 %v1574, %v1573
        %v1576 = vmul.f32 0.5, %v1575
        %v1577 = vsub.f32 1.5, %v1576
        %v1578 = vmul.f32 %v1573, %v1577
        %vm1579 = vweird.f32 %v1572
        %vm1580 = vweird.f32 %v1573
        %vm1581 = vmor %vm1579, %vm1580
        %v1582 = vsel %vm1581, %v1573, %v1578
        %v1583 = vmul.f32 %v1566, %v1582
        %v1584 = vld [vmem:[%s14] sm:$0x1]
        %v1586 = vperm.slane %v1584, 0
        %v1588 = vmul.f32 %v1583, %v1586
        %v1589 = vld [vmem:[%s15] sm:$0x1]
        %v1591 = vperm.slane %v1589, 0
        %v1593 = vadd.f32 %v1588, %v1591
        %1594 = vst.msk [vmem:[%s597] sm:$0xff] %vm633, %v1593
        %s1595 = sand.u32 %s402, 1
        %s1596 = scalar_lea.sflag [#allocation4], %s1595
        %s1597 = sand.u32 %s402, 1
        %s1598 = smul.addr %s1597, 8
        %s1599 = scalar_lea.vmem [#allocation8], %s1598
        // Predicated region
        $region97: #{tpu_custom_call.1} parent=83 // pred_check
          %p1600 = pneg %p412
        $region98: #{tpu_custom_call.1} parent=83 // pred_check_branch
          %1602 = sbr.rel (%p1600) target = $region100
        $region99: #{tpu_custom_call.1} parent=83 // pred_region
          %1604 = vsyncadd %s1596, 0
          %s1605 = sadd.s32 %s37, %s36
          %s1606 = smul.addr %s1605, 8
          %s1607 = scalar_lea.hbm %s16, %s1606
          %s1609 = sshll.u32 %s1599, 4
          %s1610 = int_to_ptr.vmem [resolvable:$true] %s1609
          %s1611 = sshll.u32 %s1607, 4
          %s1612 = int_to_ptr.hbm [resolvable:$true] %s1611
          %1614 = dma.vmem_to_hbm [thread:$0]  %s1610, 128, %s1612, %s1596
        $region100: #{tpu_custom_call.1} parent=83 // pred_fallthru
          _
      $region84: #{tpu_custom_call.1} parent=5 // pred_fallthru
        _
      %p1615 = scmp.le.s32.totalorder 2, %s27
      // Predicated region
      $region101: #{tpu_custom_call.1} parent=5 // pred_check
        %p1616 = pneg %p1615
      $region102: #{tpu_custom_call.1} parent=5 // pred_check_branch
        %1618 = sbr.rel (%p1616) target = $region104
      $region103: #{tpu_custom_call.1} parent=5 // pred_region
        %s1619 = ssub.s32 %s27, 2
        // Predicated region
        $region105: #{tpu_custom_call.1} parent=103 // pred_check
          %p1620 = pneg %p418
        $region106: #{tpu_custom_call.1} parent=103 // pred_check_branch
          %1622 = sbr.rel (%p1620) target = $region108
        $region107: #{tpu_custom_call.1} parent=103 // pred_region
          %s1623 = sand.u32 %s403, 1
          %s1624 = scalar_lea.sflag [#allocation4], %s1623
          %s1625 = sand.u32 %s403, 1
          %s1626 = smul.addr %s1625, 8
          %s1627 = scalar_lea.vmem [#allocation8], %s1626
          %1629 = dma.done %s1624, 128
        $region108: #{tpu_custom_call.1} parent=103 // pred_fallthru
          _
      $region104: #{tpu_custom_call.1} parent=5 // pred_fallthru
        _
    $region6: #{tpu_custom_call.1} parent=1 // loop_footer
      %s31 = sadd.s32 1, %s27
    $region7: #{tpu_custom_call.1} parent=1 // loop_footer_branch
      %26 = sbr.rel target = $region3
    $region8: #{tpu_custom_call.1} parent=1 // loop_exit
      _
    %1630 = vsyncpa [#allocation3], 1
    %s1631 = scalar_lea.sflag [#allocation3], 1
    %1632 = vsyncpa %s1631, 1
    %1633 = vsyncpa [#allocation6], 1
    %1634 = vsyncpa [#allocation4], 1
    %s1635 = scalar_lea.sflag [#allocation4], 1
    %1636 = vsyncpa %s1635, 1

</llo_original>
